<compile_context>
chip_gen: v7x
topology: tpu7x:2x2x1
jax: 0.10.0
libtpu: 0.0.40
codegen_flags: <defaults>
</compile_context>

<pallas_src>
import jax
import jax.numpy as jnp
from jax import lax
from jax.experimental import pallas as pl
from jax.experimental.pallas import tpu as pltpu


def _round_up(x, m):
    return (x + m - 1) // m * m


def _matmul_bias_kernel(x_ref, w_ref, b_ref, o_ref):
    # One (tile_p, K) @ (K, Cout_pad) MXU matmul + bias, written straight to o_ref
    # (no reduction grid axis -> no accumulator scratch needed).
    o_ref[...] = (
        jnp.dot(x_ref[...], w_ref[...], preferred_element_type=jnp.float32)
        + b_ref[...]
    ).astype(o_ref.dtype)


def _class_matmul(x_fold, w_fold, b_pad, *, tile_p):
    """x_fold: (P, K), w_fold: (K, Cout_pad), b_pad: (1, Cout_pad) -> (P, Cout_pad) f32."""
    P, K = x_fold.shape
    Cout_pad = w_fold.shape[1]

    tile = min(tile_p, _round_up(P, 8))
    P_pad = _round_up(P, tile)
    if P_pad != P:
        x_fold = jnp.pad(x_fold, ((0, P_pad - P), (0, 0)))

    out = pl.pallas_call(
        _matmul_bias_kernel,
        out_shape=jax.ShapeDtypeStruct((P_pad, Cout_pad), jnp.float32),
        grid_spec=pltpu.PrefetchScalarGridSpec(
            num_scalar_prefetch=0,
            grid=(P_pad // tile,),
            in_specs=[
                # row tile of the tap-folded input (pipelined across the grid)
                pl.BlockSpec((tile, K), lambda i: (i, 0)),
                # weights: grid-invariant index_map -> resident in VMEM
                pl.BlockSpec((K, Cout_pad), lambda i: (0, 0)),
                # bias: resident
                pl.BlockSpec((1, Cout_pad), lambda i: (0, 0)),
            ],
            out_specs=pl.BlockSpec((tile, Cout_pad), lambda i: (i, 0)),
        ),
        compiler_params=pltpu.CompilerParams(
            dimension_semantics=("parallel",)),  # shards row tiles across TCs (v7x)
    )(x_fold, w_fold, b_pad)
    return out[:P]


def _taps_1d(parity):
    # ConvTranspose (k=3, s=2, p=1):   od = 2*id - 1 + k
    #   od even -> k = 1, id = od//2       (input offset delta = 0)
    #   od odd  -> k = 0, id = od//2 + 1   (delta = 1)
    #              k = 2, id = od//2       (delta = 0)
    return ((1, 0),) if parity == 0 else ((0, 1), (2, 0))


def upsample3d_conv(x, weight, bias, *, stride=2, padding=1, tile_p=512):
    """ConvTranspose3d(kernel=3, stride=2, padding=1) forward.

    x:      (N, Cin, D, H, W)        (PyTorch NCDHW layout)
    weight: (Cin, Cout, 3, 3, 3)     (PyTorch ConvTranspose3d weight layout)
    bias:   (Cout,)
    returns (N, Cout, 2D-1, 2H-1, 2W-1)
    """
    N, Cin, D, H, W = x.shape
    Cin_w, Cout, kD, kH, kW = weight.shape
    assert Cin == Cin_w and (kD, kH, kW) == (3, 3, 3)
    assert stride == 2 and padding == 1

    Do, Ho, Wo = 2 * D - 1, 2 * H - 1, 2 * W - 1
    Cout_pad = _round_up(Cout, 128)  # lane-dense output stores

    # single channels-last transpose; everything below stays channels-last
    xcl = jnp.transpose(x, (0, 2, 3, 4, 1))                  # (N, D, H, W, Cin)

    w_pad = jnp.pad(weight, ((0, 0), (0, Cout_pad - Cout),
                             (0, 0), (0, 0), (0, 0)))        # (Cin, Cout_pad, 3,3,3)
    b_pad = jnp.pad(bias, (0, Cout_pad - Cout)).reshape(1, Cout_pad).astype(jnp.float32)

    out = jnp.zeros((N, Do, Ho, Wo, Cout), x.dtype)

    for pd in (0, 1):
        Dd = D if pd == 0 else D - 1
        for ph in (0, 1):
            Hh = H if ph == 0 else H - 1
            for pw in (0, 1):
                Ww = W if pw == 0 else W - 1
                if Dd == 0 or Hh == 0 or Ww == 0:
                    continue
                taps = [(kd, dd, kh, dh, kw, dw)
                        for kd, dd in _taps_1d(pd)
                        for kh, dh in _taps_1d(ph)
                        for kw, dw in _taps_1d(pw)]
                # fold taps into the contraction dim: (rows, T*Cin)
                x_fold = jnp.concatenate(
                    [xcl[:, dd:dd + Dd, dh:dh + Hh, dw:dw + Ww, :]
                     for (_, dd, _, dh, _, dw) in taps],
                    axis=-1).reshape(N * Dd * Hh * Ww, len(taps) * Cin)
                # matching folded weights: (T*Cin, Cout_pad)
                w_fold = jnp.concatenate(
                    [w_pad[:, :, kd, kh, kw] for (kd, _, kh, _, kw, _) in taps],
                    axis=0)

                res = _class_matmul(x_fold, w_fold, b_pad, tile_p=tile_p)
                res = res[:, :Cout].reshape(N, Dd, Hh, Ww, Cout).astype(x.dtype)
                out = out.at[:, pd::2, ph::2, pw::2, :].set(res)

    return jnp.transpose(out, (0, 4, 1, 2, 3))               # back to NCDHW


if __name__ == "__main__":
    key = jax.random.PRNGKey(0)
    k1, k2, k3 = jax.random.split(key, 3)

    N, Cin, Cout, D, H, W = 2, 4, 8, 6, 6, 6
    x = jax.random.normal(k1, (N, Cin, D, H, W), jnp.float32)
    weight = 0.1 * jax.random.normal(k2, (Cin, Cout, 3, 3, 3), jnp.float32)
    bias = 0.1 * jax.random.normal(k3, (Cout,), jnp.float32)

    fwd = jax.jit(upsample3d_conv)
    out = jax.block_until_ready(fwd(x, weight, bias))

    # reference: ConvTranspose3d == lhs-dilated regular conv with flipped kernel
    w_oidhw = jnp.transpose(weight, (1, 0, 2, 3, 4))[:, :, ::-1, ::-1, ::-1]
    ref = lax.conv_general_dilated(
        x, w_oidhw, window_strides=(1, 1, 1),
        padding=[(1, 1)] * 3, lhs_dilation=(2, 2, 2),
        dimension_numbers=("NCDHW", "OIDHW", "NCDHW"))
    ref = ref + bias.reshape(1, Cout, 1, 1, 1)

    assert out.shape == (N, Cout, 2 * D - 1, 2 * H - 1, 2 * W - 1), out.shape
    err = float(jnp.max(jnp.abs(out - ref)))
    assert err < 1e-2, err
    print("KERNEL_OK")
</pallas_src>

<mosaic_0001>
module attributes {stable_mosaic.version = 11 : i64} {
  func.func @_matmul_bias_kernel(%arg0: i32, %arg1: memref<432x4xf32, #tpu.memory_space<vmem>>, %arg2: memref<4x128xf32, #tpu.memory_space<vmem>>, %arg3: memref<1x128xf32, #tpu.memory_space<vmem>>, %arg4: memref<432x128xf32, #tpu.memory_space<vmem>>) attributes {dimension_semantics = [#tpu.dimension_semantics<parallel>], iteration_bounds = array<i64: 1>, scalar_prefetch = 0 : i64, scratch_operands = 0 : i64, tpu.core_type = #tpu.core_type<tc>, window_params = [{transform_indices = @transform_0, window_bounds = array<i64: 432, 4>}, {pipeline_mode = #tpu.pipeline_mode<synchronous>, transform_indices = @transform_1, window_bounds = array<i64: 4, 128>}, {pipeline_mode = #tpu.pipeline_mode<synchronous>, transform_indices = @transform_2, window_bounds = array<i64: 1, 128>}, {transform_indices = @transform_3, window_bounds = array<i64: 432, 128>}]} {
    %c0 = arith.constant 0 : index
    %c0_0 = arith.constant 0 : index
    %0 = vector.load %arg1[%c0, %c0_0] : memref<432x4xf32, #tpu.memory_space<vmem>>, vector<432x4xf32>
    %c0_1 = arith.constant 0 : index
    %c0_2 = arith.constant 0 : index
    %1 = vector.load %arg2[%c0_1, %c0_2] : memref<4x128xf32, #tpu.memory_space<vmem>>, vector<4x128xf32>
    %cst = arith.constant dense<0.000000e+00> : vector<432x128xf32>
    %2 = tpu.matmul %0, %1, %cst {dimension_numbers = #tpu.dot_dimension_numbers<[1], [0], [0], [1], [0, 0, 1, 1], [], []>} : vector<432x4xf32>, vector<4x128xf32>, vector<432x128xf32> -> vector<432x128xf32>
    %c0_3 = arith.constant 0 : index
    %c0_4 = arith.constant 0 : index
    %3 = vector.load %arg3[%c0_3, %c0_4] : memref<1x128xf32, #tpu.memory_space<vmem>>, vector<1x128xf32>
    %4 = vector.broadcast %3 : vector<1x128xf32> to vector<432x128xf32>
    %5 = arith.addf %2, %4 : vector<432x128xf32>
    %c0_5 = arith.constant 0 : index
    %c0_6 = arith.constant 0 : index
    %6 = vector.load %arg4[%c0_5, %c0_6] : memref<432x128xf32, #tpu.memory_space<vmem>>, vector<432x128xf32>
    tpu.vector_store %arg4[%c0_5, %c0_6], %5 {strides = array<i32>} : memref<432x128xf32, #tpu.memory_space<vmem>>, vector<432x128xf32>,
    return
  }
  func.func @transform_0(%arg0: i32) -> (i32, i32) {
    %c0_i32 = arith.constant 0 : i32
    %c0_i32_0 = arith.constant 0 : i32
    return %arg0, %c0_i32 : i32, i32
  }
  func.func @transform_1(%arg0: i32) -> (i32, i32) {
    %c0_i32 = arith.constant 0 : i32
    %c0_i32_0 = arith.constant 0 : i32
    %c0_i32_1 = arith.constant 0 : i32
    return %c0_i32, %c0_i32_0 : i32, i32
  }
  func.func @transform_2(%arg0: i32) -> (i32, i32) {
    %c0_i32 = arith.constant 0 : i32
    %c0_i32_0 = arith.constant 0 : i32
    %c0_i32_1 = arith.constant 0 : i32
    return %c0_i32, %c0_i32_0 : i32, i32
  }
  func.func @transform_3(%arg0: i32) -> (i32, i32) {
    %c0_i32 = arith.constant 0 : i32
    %c0_i32_0 = arith.constant 0 : i32
    return %arg0, %c0_i32 : i32, i32
  }
}

module attributes {stable_mosaic.version = 11 : i64} {
  func.func @_matmul_bias_kernel(%arg0: i32, %arg1: memref<360x8xf32, #tpu.memory_space<vmem>>, %arg2: memref<8x128xf32, #tpu.memory_space<vmem>>, %arg3: memref<1x128xf32, #tpu.memory_space<vmem>>, %arg4: memref<360x128xf32, #tpu.memory_space<vmem>>) attributes {dimension_semantics = [#tpu.dimension_semantics<parallel>], iteration_bounds = array<i64: 1>, scalar_prefetch = 0 : i64, scratch_operands = 0 : i64, tpu.core_type = #tpu.core_type<tc>, window_params = [{transform_indices = @transform_0, window_bounds = array<i64: 360, 8>}, {pipeline_mode = #tpu.pipeline_mode<synchronous>, transform_indices = @transform_1, window_bounds = array<i64: 8, 128>}, {pipeline_mode = #tpu.pipeline_mode<synchronous>, transform_indices = @transform_2, window_bounds = array<i64: 1, 128>}, {transform_indices = @transform_3, window_bounds = array<i64: 360, 128>}]} {
    %c0 = arith.constant 0 : index
    %c0_0 = arith.constant 0 : index
    %0 = vector.load %arg1[%c0, %c0_0] : memref<360x8xf32, #tpu.memory_space<vmem>>, vector<360x8xf32>
    %c0_1 = arith.constant 0 : index
    %c0_2 = arith.constant 0 : index
    %1 = vector.load %arg2[%c0_1, %c0_2] : memref<8x128xf32, #tpu.memory_space<vmem>>, vector<8x128xf32>
    %cst = arith.constant dense<0.000000e+00> : vector<360x128xf32>
    %2 = tpu.matmul %0, %1, %cst {dimension_numbers = #tpu.dot_dimension_numbers<[1], [0], [0], [1], [0, 0, 1, 1], [], []>} : vector<360x8xf32>, vector<8x128xf32>, vector<360x128xf32> -> vector<360x128xf32>
    %c0_3 = arith.constant 0 : index
    %c0_4 = arith.constant 0 : index
    %3 = vector.load %arg3[%c0_3, %c0_4] : memref<1x128xf32, #tpu.memory_space<vmem>>, vector<1x128xf32>
    %4 = vector.broadcast %3 : vector<1x128xf32> to vector<360x128xf32>
    %5 = arith.addf %2, %4 : vector<360x128xf32>
    %c0_5 = arith.constant 0 : index
    %c0_6 = arith.constant 0 : index
    %6 = vector.load %arg4[%c0_5, %c0_6] : memref<360x128xf32, #tpu.memory_space<vmem>>, vector<360x128xf32>
    tpu.vector_store %arg4[%c0_5, %c0_6], %5 {strides = array<i32>} : memref<360x128xf32, #tpu.memory_space<vmem>>, vector<360x128xf32>,
    return
  }
  func.func @transform_0(%arg0: i32) -> (i32, i32) {
    %c0_i32 = arith.constant 0 : i32
    %c0_i32_0 = arith.constant 0 : i32
    return %arg0, %c0_i32 : i32, i32
  }
  func.func @transform_1(%arg0: i32) -> (i32, i32) {
    %c0_i32 = arith.constant 0 : i32
    %c0_i32_0 = arith.constant 0 : i32
    %c0_i32_1 = arith.constant 0 : i32
    return %c0_i32, %c0_i32_0 : i32, i32
  }
  func.func @transform_2(%arg0: i32) -> (i32, i32) {
    %c0_i32 = arith.constant 0 : i32
    %c0_i32_0 = arith.constant 0 : i32
    %c0_i32_1 = arith.constant 0 : i32
    return %c0_i32, %c0_i32_0 : i32, i32
  }
  func.func @transform_3(%arg0: i32) -> (i32, i32) {
    %c0_i32 = arith.constant 0 : i32
    %c0_i32_0 = arith.constant 0 : i32
    return %arg0, %c0_i32 : i32, i32
  }
}

module attributes {stable_mosaic.version = 11 : i64} {
  func.func @_matmul_bias_kernel(%arg0: i32, %arg1: memref<304x16xf32, #tpu.memory_space<vmem>>, %arg2: memref<16x128xf32, #tpu.memory_space<vmem>>, %arg3: memref<1x128xf32, #tpu.memory_space<vmem>>, %arg4: memref<304x128xf32, #tpu.memory_space<vmem>>) attributes {dimension_semantics = [#tpu.dimension_semantics<parallel>], iteration_bounds = array<i64: 1>, scalar_prefetch = 0 : i64, scratch_operands = 0 : i64, tpu.core_type = #tpu.core_type<tc>, window_params = [{transform_indices = @transform_0, window_bounds = array<i64: 304, 16>}, {pipeline_mode = #tpu.pipeline_mode<synchronous>, transform_indices = @transform_1, window_bounds = array<i64: 16, 128>}, {pipeline_mode = #tpu.pipeline_mode<synchronous>, transform_indices = @transform_2, window_bounds = array<i64: 1, 128>}, {transform_indices = @transform_3, window_bounds = array<i64: 304, 128>}]} {
    %c0 = arith.constant 0 : index
    %c0_0 = arith.constant 0 : index
    %0 = vector.load %arg1[%c0, %c0_0] : memref<304x16xf32, #tpu.memory_space<vmem>>, vector<304x16xf32>
    %c0_1 = arith.constant 0 : index
    %c0_2 = arith.constant 0 : index
    %1 = vector.load %arg2[%c0_1, %c0_2] : memref<16x128xf32, #tpu.memory_space<vmem>>, vector<16x128xf32>
    %cst = arith.constant dense<0.000000e+00> : vector<304x128xf32>
    %2 = tpu.matmul %0, %1, %cst {dimension_numbers = #tpu.dot_dimension_numbers<[1], [0], [0], [1], [0, 0, 1, 1], [], []>} : vector<304x16xf32>, vector<16x128xf32>, vector<304x128xf32> -> vector<304x128xf32>
    %c0_3 = arith.constant 0 : index
    %c0_4 = arith.constant 0 : index
    %3 = vector.load %arg3[%c0_3, %c0_4] : memref<1x128xf32, #tpu.memory_space<vmem>>, vector<1x128xf32>
    %4 = vector.broadcast %3 : vector<1x128xf32> to vector<304x128xf32>
    %5 = arith.addf %2, %4 : vector<304x128xf32>
    %c0_5 = arith.constant 0 : index
    %c0_6 = arith.constant 0 : index
    %6 = vector.load %arg4[%c0_5, %c0_6] : memref<304x128xf32, #tpu.memory_space<vmem>>, vector<304x128xf32>
    tpu.vector_store %arg4[%c0_5, %c0_6], %5 {strides = array<i32>} : memref<304x128xf32, #tpu.memory_space<vmem>>, vector<304x128xf32>,
    return
  }
  func.func @transform_0(%arg0: i32) -> (i32, i32) {
    %c0_i32 = arith.constant 0 : i32
    %c0_i32_0 = arith.constant 0 : i32
    return %arg0, %c0_i32 : i32, i32
  }
  func.func @transform_1(%arg0: i32) -> (i32, i32) {
    %c0_i32 = arith.constant 0 : i32
    %c0_i32_0 = arith.constant 0 : i32
    %c0_i32_1 = arith.constant 0 : i32
    return %c0_i32, %c0_i32_0 : i32, i32
  }
  func.func @transform_2(%arg0: i32) -> (i32, i32) {
    %c0_i32 = arith.constant 0 : i32
    %c0_i32_0 = arith.constant 0 : i32
    %c0_i32_1 = arith.constant 0 : i32
    return %c0_i32, %c0_i32_0 : i32, i32
  }
  func.func @transform_3(%arg0: i32) -> (i32, i32) {
    %c0_i32 = arith.constant 0 : i32
    %c0_i32_0 = arith.constant 0 : i32
    return %arg0, %c0_i32 : i32, i32
  }
}

module attributes {stable_mosaic.version = 11 : i64} {
  func.func @_matmul_bias_kernel(%arg0: i32, %arg1: memref<256x32xf32, #tpu.memory_space<vmem>>, %arg2: memref<32x128xf32, #tpu.memory_space<vmem>>, %arg3: memref<1x128xf32, #tpu.memory_space<vmem>>, %arg4: memref<256x128xf32, #tpu.memory_space<vmem>>) attributes {dimension_semantics = [#tpu.dimension_semantics<parallel>], iteration_bounds = array<i64: 1>, scalar_prefetch = 0 : i64, scratch_operands = 0 : i64, tpu.core_type = #tpu.core_type<tc>, window_params = [{transform_indices = @transform_0, window_bounds = array<i64: 256, 32>}, {pipeline_mode = #tpu.pipeline_mode<synchronous>, transform_indices = @transform_1, window_bounds = array<i64: 32, 128>}, {pipeline_mode = #tpu.pipeline_mode<synchronous>, transform_indices = @transform_2, window_bounds = array<i64: 1, 128>}, {transform_indices = @transform_3, window_bounds = array<i64: 256, 128>}]} {
    %c0 = arith.constant 0 : index
    %c0_0 = arith.constant 0 : index
    %0 = vector.load %arg1[%c0, %c0_0] : memref<256x32xf32, #tpu.memory_space<vmem>>, vector<256x32xf32>
    %c0_1 = arith.constant 0 : index
    %c0_2 = arith.constant 0 : index
    %1 = vector.load %arg2[%c0_1, %c0_2] : memref<32x128xf32, #tpu.memory_space<vmem>>, vector<32x128xf32>
    %cst = arith.constant dense<0.000000e+00> : vector<256x128xf32>
    %2 = tpu.matmul %0, %1, %cst {dimension_numbers = #tpu.dot_dimension_numbers<[1], [0], [0], [1], [0, 0, 1, 1], [], []>} : vector<256x32xf32>, vector<32x128xf32>, vector<256x128xf32> -> vector<256x128xf32>
    %c0_3 = arith.constant 0 : index
    %c0_4 = arith.constant 0 : index
    %3 = vector.load %arg3[%c0_3, %c0_4] : memref<1x128xf32, #tpu.memory_space<vmem>>, vector<1x128xf32>
    %4 = vector.broadcast %3 : vector<1x128xf32> to vector<256x128xf32>
    %5 = arith.addf %2, %4 : vector<256x128xf32>
    %c0_5 = arith.constant 0 : index
    %c0_6 = arith.constant 0 : index
    %6 = vector.load %arg4[%c0_5, %c0_6] : memref<256x128xf32, #tpu.memory_space<vmem>>, vector<256x128xf32>
    tpu.vector_store %arg4[%c0_5, %c0_6], %5 {strides = array<i32>} : memref<256x128xf32, #tpu.memory_space<vmem>>, vector<256x128xf32>,
    return
  }
  func.func @transform_0(%arg0: i32) -> (i32, i32) {
    %c0_i32 = arith.constant 0 : i32
    %c0_i32_0 = arith.constant 0 : i32
    return %arg0, %c0_i32 : i32, i32
  }
  func.func @transform_1(%arg0: i32) -> (i32, i32) {
    %c0_i32 = arith.constant 0 : i32
    %c0_i32_0 = arith.constant 0 : i32
    %c0_i32_1 = arith.constant 0 : i32
    return %c0_i32, %c0_i32_0 : i32, i32
  }
  func.func @transform_2(%arg0: i32) -> (i32, i32) {
    %c0_i32 = arith.constant 0 : i32
    %c0_i32_0 = arith.constant 0 : i32
    %c0_i32_1 = arith.constant 0 : i32
    return %c0_i32, %c0_i32_0 : i32, i32
  }
  func.func @transform_3(%arg0: i32) -> (i32, i32) {
    %c0_i32 = arith.constant 0 : i32
    %c0_i32_0 = arith.constant 0 : i32
    return %arg0, %c0_i32 : i32, i32
  }
}

</mosaic_0001>

<llo_original>
// kernel: upsample3d_conv.8
$region0: #{upsample3d_conv.8}
  #allocation0 [shape = 'u32[]', space=smem, size = 0x4, offset = 0x4, fixed_abs, tag = 'smem constant byte address 0x4 - core index']
  #allocation1 [shape = 'u32[144,128]{1,0:T(1,128)}', space=vmem, size = 0x12000, scoped, tag = 'internal scratch']
  %s0 = inlined_call_operand.vmem [shape: f32[432,4], index: 0, kind: input, shape index: {}]
  %s1 = inlined_call_operand.vmem [shape: f32[4,128], index: 1, kind: input, shape index: {}]
  %s2 = inlined_call_operand.vmem [shape: f32[1,128], index: 2, kind: input, shape index: {}]
  %s3 = inlined_call_operand.vmem [shape: f32[432,128], index: 3, kind: output, shape index: {}]
  %s4 = sld [smem:[#allocation0]]
  $region22: #{upsample3d_conv.8} parent=0
    _
  %s6 = ssub.s32 1, %s4
  %s7 = scalar_select 0, %s6, %s4
  // Predicated region
  $region2: #{upsample3d_conv.8} parent=0 // pred_check
    _
  $region3: #{upsample3d_conv.8} parent=0 // pred_check_branch
    %9 = sbr.rel (0) target = $region5
  $region4: #{upsample3d_conv.8} parent=0 // pred_region
    _
  $region5: #{upsample3d_conv.8} parent=0 // pred_fallthru
    _
  // Predicated region
  $region6: #{upsample3d_conv.8} parent=0 // pred_check
    _
  $region7: #{upsample3d_conv.8} parent=0 // pred_check_branch
    %11 = sbr.rel (0) target = $region9
  $region8: #{upsample3d_conv.8} parent=0 // pred_region
    _
  $region9: #{upsample3d_conv.8} parent=0 // pred_fallthru
    _
  // Predicated region
  $region10: #{upsample3d_conv.8} parent=0 // pred_check
    _
  $region11: #{upsample3d_conv.8} parent=0 // pred_check_branch
    %13 = sbr.rel (0) target = $region13
  $region12: #{upsample3d_conv.8} parent=0 // pred_region
    _
  $region13: #{upsample3d_conv.8} parent=0 // pred_fallthru
    _
  %v14 = vld [vmem:[%s0] sm:$0xff]
  %v15 = vld [vmem:[%s0 + $0x8] sm:$0xff]
  %v16 = vld [vmem:[%s0 + $0x10] sm:$0xff]
  %v17 = vld [vmem:[%s0 + $0x18] sm:$0xff]
  %v18 = vld [vmem:[%s0 + $0x20] sm:$0xff]
  %v19 = vld [vmem:[%s0 + $0x28] sm:$0xff]
  %v20 = vld [vmem:[%s0 + $0x30] sm:$0xff]
  %v21 = vld [vmem:[%s0 + $0x38] sm:$0xff]
  %v22 = vld [vmem:[%s0 + $0x40] sm:$0xff]
  %v23 = vld [vmem:[%s0 + $0x48] sm:$0xff]
  %v24 = vld [vmem:[%s0 + $0x50] sm:$0xff]
  %v25 = vld [vmem:[%s0 + $0x58] sm:$0xff]
  %v26 = vld [vmem:[%s0 + $0x60] sm:$0xff]
  %v27 = vld [vmem:[%s0 + $0x68] sm:$0xff]
  %v28 = vld [vmem:[%s0 + $0x70] sm:$0xff]
  %v29 = vld [vmem:[%s0 + $0x78] sm:$0xff]
  %v30 = vld [vmem:[%s0 + $0x80] sm:$0xff]
  %v31 = vld [vmem:[%s0 + $0x88] sm:$0xff]
  %v32 = vld [vmem:[%s0 + $0x90] sm:$0xff]
  %v33 = vld [vmem:[%s0 + $0x98] sm:$0xff]
  %v34 = vld [vmem:[%s0 + $0xa0] sm:$0xff]
  %v35 = vld [vmem:[%s0 + $0xa8] sm:$0xff]
  %v36 = vld [vmem:[%s0 + $0xb0] sm:$0xff]
  %v37 = vld [vmem:[%s0 + $0xb8] sm:$0xff]
  %v38 = vld [vmem:[%s0 + $0xc0] sm:$0xff]
  %v39 = vld [vmem:[%s0 + $0xc8] sm:$0xff]
  %v40 = vld [vmem:[%s0 + $0xd0] sm:$0xff]
  %v41 = vld [vmem:[%s0 + $0xd8] sm:$0xff]
  %v42 = vld [vmem:[%s0 + $0xe0] sm:$0xff]
  %v43 = vld [vmem:[%s0 + $0xe8] sm:$0xff]
  %v44 = vld [vmem:[%s0 + $0xf0] sm:$0xff]
  %v45 = vld [vmem:[%s0 + $0xf8] sm:$0xff]
  %v46 = vld [vmem:[%s0 + $0x100] sm:$0xff]
  %v47 = vld [vmem:[%s0 + $0x108] sm:$0xff]
  %v48 = vld [vmem:[%s0 + $0x110] sm:$0xff]
  %v49 = vld [vmem:[%s0 + $0x118] sm:$0xff]
  %v50 = vld [vmem:[%s0 + $0x120] sm:$0xff]
  %v51 = vld [vmem:[%s0 + $0x128] sm:$0xff]
  %v52 = vld [vmem:[%s0 + $0x130] sm:$0xff]
  %v53 = vld [vmem:[%s0 + $0x138] sm:$0xff]
  %v54 = vld [vmem:[%s0 + $0x140] sm:$0xff]
  %v55 = vld [vmem:[%s0 + $0x148] sm:$0xff]
  %v56 = vld [vmem:[%s0 + $0x150] sm:$0xff]
  %v57 = vld [vmem:[%s0 + $0x158] sm:$0xff]
  %v58 = vld [vmem:[%s0 + $0x160] sm:$0xff]
  %v59 = vld [vmem:[%s0 + $0x168] sm:$0xff]
  %v60 = vld [vmem:[%s0 + $0x170] sm:$0xff]
  %v61 = vld [vmem:[%s0 + $0x178] sm:$0xff]
  %v62 = vld [vmem:[%s0 + $0x180] sm:$0xff]
  %v63 = vld [vmem:[%s0 + $0x188] sm:$0xff]
  %v64 = vld [vmem:[%s0 + $0x190] sm:$0xff]
  %v65 = vld [vmem:[%s0 + $0x198] sm:$0xff]
  %v66 = vld [vmem:[%s0 + $0x1a0] sm:$0xff]
  %v67 = vld [vmem:[%s0 + $0x1a8] sm:$0xff]
  %v68 = vld [vmem:[%s1] sm:$0xf]
  %v69 = vld [vmem:[%s2] sm:$0x1]
  %v71 = vlaneseq
  %v72 = vshrl.u32 %v71, 7
  %v73 = vsub.s32 0, %v72
  %v74 = vrot.slane %v69, %v73
  %vm76 = vcmask 31744
  %v78 = vsel %vm76, %v14, 0
  %v81 = vsel %vm76, %v15, 0
  %v84 = vsel %vm76, %v16, 0
  %v87 = vsel %vm76, %v17, 0
  %v90 = vsel %vm76, %v18, 0
  %v93 = vsel %vm76, %v19, 0
  %v96 = vsel %vm76, %v20, 0
  %v99 = vsel %vm76, %v21, 0
  %v102 = vsel %vm76, %v22, 0
  %v105 = vsel %vm76, %v23, 0
  %v108 = vsel %vm76, %v24, 0
  %v111 = vsel %vm76, %v25, 0
  %v114 = vsel %vm76, %v26, 0
  %v117 = vsel %vm76, %v27, 0
  %v120 = vsel %vm76, %v28, 0
  %v123 = vsel %vm76, %v29, 0
  %v126 = vsel %vm76, %v30, 0
  %v129 = vsel %vm76, %v31, 0
  %v132 = vsel %vm76, %v32, 0
  %v135 = vsel %vm76, %v33, 0
  %v138 = vsel %vm76, %v34, 0
  %v141 = vsel %vm76, %v35, 0
  %v144 = vsel %vm76, %v36, 0
  %v147 = vsel %vm76, %v37, 0
  %v150 = vsel %vm76, %v38, 0
  %v153 = vsel %vm76, %v39, 0
  %v156 = vsel %vm76, %v40, 0
  %v159 = vsel %vm76, %v41, 0
  %v162 = vsel %vm76, %v42, 0
  %v165 = vsel %vm76, %v43, 0
  %v168 = vsel %vm76, %v44, 0
  %v171 = vsel %vm76, %v45, 0
  %v174 = vsel %vm76, %v46, 0
  %v177 = vsel %vm76, %v47, 0
  %v180 = vsel %vm76, %v48, 0
  %v183 = vsel %vm76, %v49, 0
  %v186 = vsel %vm76, %v50, 0
  %v189 = vsel %vm76, %v51, 0
  %v192 = vsel %vm76, %v52, 0
  %v195 = vsel %vm76, %v53, 0
  %v198 = vsel %vm76, %v54, 0
  %v201 = vsel %vm76, %v55, 0
  %v204 = vsel %vm76, %v56, 0
  %v207 = vsel %vm76, %v57, 0
  %v210 = vsel %vm76, %v58, 0
  %v213 = vsel %vm76, %v59, 0
  %v216 = vsel %vm76, %v60, 0
  %v219 = vsel %vm76, %v61, 0
  %v222 = vsel %vm76, %v62, 0
  %v225 = vsel %vm76, %v63, 0
  %v228 = vsel %vm76, %v64, 0
  %v231 = vsel %vm76, %v65, 0
  %v234 = vsel %vm76, %v66, 0
  %v237 = vsel %vm76, %v67, 0
  %vm239 = vcmask 1043456
  %v241 = vsel %vm239, %v68, 0
  %243 = vmatprep.subr.mxu0 0.0
  %244 = vmatpush1.msra.mxu0 %v241
  %245 = vmatprep.subr.mxu0 0.0
  %246 = vmatpush1.msra.mxu0 0.0
  %247 = vmatprep.subr.mxu0 0.0
  %248 = vmatpush1.msra.mxu0 0.0
  %249 = vmatprep.subr.mxu0 0.0
  %250 = vmatpush1.msra.mxu0 0.0
  %251 = vmatprep.subr.mxu0 0.0
  %252 = vmatpush1.msra.mxu0 0.0
  %253 = vmatprep.subr.mxu0 0.0
  %254 = vmatpush1.msra.mxu0 0.0
  %255 = vmatprep.subr.mxu0 0.0
  %256 = vmatpush1.msra.mxu0 0.0
  %257 = vmatprep.subr.mxu0 0.0
  %258 = vmatpush1.msra.mxu0 0.0
  %259 = vmatprep.subr.mxu0 0.0
  %260 = vmatpush1.msra.mxu0 0.0
  %261 = vmatprep.subr.mxu0 0.0
  %262 = vmatpush1.msra.mxu0 0.0
  %263 = vmatprep.subr.mxu0 0.0
  %264 = vmatpush1.msra.mxu0 0.0
  %265 = vmatprep.subr.mxu0 0.0
  %266 = vmatpush1.msra.mxu0 0.0
  %267 = vmatprep.subr.mxu0 0.0
  %268 = vmatpush1.msra.mxu0 0.0
  %269 = vmatprep.subr.mxu0 0.0
  %270 = vmatpush1.msra.mxu0 0.0
  %271 = vmatprep.subr.mxu0 0.0
  %272 = vmatpush1.msra.mxu0 0.0
  %273 = vmatprep.subr.mxu0 0.0
  %274 = vmatpush1.msra.mxu0 0.0
  %275 = vmatprep.subr.mxu0 0.0
  %276 = vmatpush1.msra.mxu0 0.0
  %277 = vmatprep.subr.mxu0 0.0
  %278 = vmatpush1.msra.mxu0 0.0
  %279 = vmatprep.subr.mxu0 0.0
  %280 = vmatpush1.msra.mxu0 0.0
  %281 = vmatprep.subr.mxu0 0.0
  %282 = vmatpush1.msra.mxu0 0.0
  %283 = vmatprep.subr.mxu0 0.0
  %284 = vmatpush1.msra.mxu0 0.0
  %285 = vmatprep.subr.mxu0 0.0
  %286 = vmatpush1.msra.mxu0 0.0
  %287 = vmatprep.subr.mxu0 0.0
  %288 = vmatpush1.msra.mxu0 0.0
  %289 = vmatprep.subr.mxu0 0.0
  %290 = vmatpush1.msra.mxu0 0.0
  %291 = vmatprep.subr.mxu0 0.0
  %292 = vmatpush1.msra.mxu0 0.0
  %293 = vmatprep.subr.mxu0 0.0
  %294 = vmatpush1.msra.mxu0 0.0
  %295 = vmatprep.subr.mxu0 0.0
  %296 = vmatpush1.msra.mxu0 0.0
  %297 = vmatprep.subr.mxu0 0.0
  %298 = vmatpush1.msra.mxu0 0.0
  %299 = vmatprep.subr.mxu0 0.0
  %300 = vmatpush1.msra.mxu0 0.0
  %301 = vmatprep.subr.mxu0 0.0
  %302 = vmatpush1.msra.mxu0 0.0
  %303 = vmatprep.subr.mxu0 0.0
  %304 = vmatpush1.msra.mxu0 0.0
  %305 = vmatprep.subr.mxu0 0.0
  %306 = vmatpush1.msra.mxu0 0.0
  %307 = vmatprep.mubr.f32.mxu0 0.0
  %308 = vmatmul.mubr.f32.gmra.mrb[0].mxu0 %v78
  %v309 = vpop.f32.mrb[0].mxu0
  %v310 = vadd.f32 %v74, %v309
  %v311 = vpop.f32.mrb[0].mxu0
  %312 = vmatprep.mubr.f32.mxu0 0.0
  %313 = vmatmul.mubr.f32.gmra.mrb[0].mxu0 %v81
  %v314 = vpop.f32.mrb[0].mxu0
  %v315 = vadd.f32 %v74, %v314
  %v316 = vpop.f32.mrb[0].mxu0
  %317 = vmatprep.mubr.f32.mxu0 0.0
  %318 = vmatmul.mubr.f32.gmra.mrb[0].mxu0 %v84
  %v319 = vpop.f32.mrb[0].mxu0
  %v320 = vadd.f32 %v74, %v319
  %v321 = vpop.f32.mrb[0].mxu0
  %322 = vmatprep.mubr.f32.mxu0 0.0
  %323 = vmatmul.mubr.f32.gmra.mrb[0].mxu0 %v87
  %v324 = vpop.f32.mrb[0].mxu0
  %v325 = vadd.f32 %v74, %v324
  %v326 = vpop.f32.mrb[0].mxu0
  %327 = vmatprep.mubr.f32.mxu0 0.0
  %328 = vmatmul.mubr.f32.gmra.mrb[0].mxu0 %v90
  %v329 = vpop.f32.mrb[0].mxu0
  %v330 = vadd.f32 %v74, %v329
  %v331 = vpop.f32.mrb[0].mxu0
  %332 = vmatprep.mubr.f32.mxu0 0.0
  %333 = vmatmul.mubr.f32.gmra.mrb[0].mxu0 %v93
  %v334 = vpop.f32.mrb[0].mxu0
  %v335 = vadd.f32 %v74, %v334
  %v336 = vpop.f32.mrb[0].mxu0
  %337 = vmatprep.mubr.f32.mxu0 0.0
  %338 = vmatmul.mubr.f32.gmra.mrb[0].mxu0 %v96
  %v339 = vpop.f32.mrb[0].mxu0
  %v340 = vadd.f32 %v74, %v339
  %v341 = vpop.f32.mrb[0].mxu0
  %342 = vmatprep.mubr.f32.mxu0 0.0
  %343 = vmatmul.mubr.f32.gmra.mrb[0].mxu0 %v99
  %v344 = vpop.f32.mrb[0].mxu0
  %v345 = vadd.f32 %v74, %v344
  %v346 = vpop.f32.mrb[0].mxu0
  %347 = vmatprep.mubr.f32.mxu0 0.0
  %348 = vmatmul.mubr.f32.gmra.mrb[0].mxu0 %v102
  %v349 = vpop.f32.mrb[0].mxu0
  %v350 = vadd.f32 %v74, %v349
  %v351 = vpop.f32.mrb[0].mxu0
  %352 = vmatprep.mubr.f32.mxu0 0.0
  %353 = vmatmul.mubr.f32.gmra.mrb[0].mxu0 %v105
  %v354 = vpop.f32.mrb[0].mxu0
  %v355 = vadd.f32 %v74, %v354
  %v356 = vpop.f32.mrb[0].mxu0
  %357 = vmatprep.mubr.f32.mxu0 0.0
  %358 = vmatmul.mubr.f32.gmra.mrb[0].mxu0 %v108
  %v359 = vpop.f32.mrb[0].mxu0
  %v360 = vadd.f32 %v74, %v359
  %v361 = vpop.f32.mrb[0].mxu0
  %362 = vmatprep.mubr.f32.mxu0 0.0
  %363 = vmatmul.mubr.f32.gmra.mrb[0].mxu0 %v111
  %v364 = vpop.f32.mrb[0].mxu0
  %v365 = vadd.f32 %v74, %v364
  %v366 = vpop.f32.mrb[0].mxu0
  %367 = vmatprep.mubr.f32.mxu0 0.0
  %368 = vmatmul.mubr.f32.gmra.mrb[0].mxu0 %v114
  %v369 = vpop.f32.mrb[0].mxu0
  %v370 = vadd.f32 %v74, %v369
  %v371 = vpop.f32.mrb[0].mxu0
  %372 = vmatprep.mubr.f32.mxu0 0.0
  %373 = vmatmul.mubr.f32.gmra.mrb[0].mxu0 %v117
  %v374 = vpop.f32.mrb[0].mxu0
  %v375 = vadd.f32 %v74, %v374
  %v376 = vpop.f32.mrb[0].mxu0
  %377 = vmatprep.mubr.f32.mxu0 0.0
  %378 = vmatmul.mubr.f32.gmra.mrb[0].mxu0 %v120
  %v379 = vpop.f32.mrb[0].mxu0
  %v380 = vadd.f32 %v74, %v379
  %v381 = vpop.f32.mrb[0].mxu0
  %382 = vmatprep.mubr.f32.mxu0 0.0
  %383 = vmatmul.mubr.f32.gmra.mrb[0].mxu0 %v123
  %v384 = vpop.f32.mrb[0].mxu0
  %v385 = vadd.f32 %v74, %v384
  %v386 = vpop.f32.mrb[0].mxu0
  %387 = vmatprep.mubr.f32.mxu0 0.0
  %388 = vmatmul.mubr.f32.gmra.mrb[0].mxu0 %v126
  %v389 = vpop.f32.mrb[0].mxu0
  %v390 = vadd.f32 %v74, %v389
  %v391 = vpop.f32.mrb[0].mxu0
  %392 = vmatprep.mubr.f32.mxu0 0.0
  %393 = vmatmul.mubr.f32.gmra.mrb[0].mxu0 %v129
  %v394 = vpop.f32.mrb[0].mxu0
  %v395 = vadd.f32 %v74, %v394
  %v396 = vpop.f32.mrb[0].mxu0
  %397 = vmatprep.mubr.f32.mxu0 0.0
  %398 = vmatmul.mubr.f32.gmra.mrb[0].mxu0 %v132
  %v399 = vpop.f32.mrb[0].mxu0
  %v400 = vadd.f32 %v74, %v399
  %v401 = vpop.f32.mrb[0].mxu0
  %402 = vmatprep.mubr.f32.mxu0 0.0
  %403 = vmatmul.mubr.f32.gmra.mrb[0].mxu0 %v135
  %v404 = vpop.f32.mrb[0].mxu0
  %v405 = vadd.f32 %v74, %v404
  %v406 = vpop.f32.mrb[0].mxu0
  %407 = vmatprep.mubr.f32.mxu0 0.0
  %408 = vmatmul.mubr.f32.gmra.mrb[0].mxu0 %v138
  %v409 = vpop.f32.mrb[0].mxu0
  %v410 = vadd.f32 %v74, %v409
  %v411 = vpop.f32.mrb[0].mxu0
  %412 = vmatprep.mubr.f32.mxu0 0.0
  %413 = vmatmul.mubr.f32.gmra.mrb[0].mxu0 %v141
  %v414 = vpop.f32.mrb[0].mxu0
  %v415 = vadd.f32 %v74, %v414
  %v416 = vpop.f32.mrb[0].mxu0
  %417 = vmatprep.mubr.f32.mxu0 0.0
  %418 = vmatmul.mubr.f32.gmra.mrb[0].mxu0 %v144
  %v419 = vpop.f32.mrb[0].mxu0
  %v420 = vadd.f32 %v74, %v419
  %v421 = vpop.f32.mrb[0].mxu0
  %422 = vmatprep.mubr.f32.mxu0 0.0
  %423 = vmatmul.mubr.f32.gmra.mrb[0].mxu0 %v147
  %v424 = vpop.f32.mrb[0].mxu0
  %v425 = vadd.f32 %v74, %v424
  %v426 = vpop.f32.mrb[0].mxu0
  %427 = vmatprep.mubr.f32.mxu0 0.0
  %428 = vmatmul.mubr.f32.gmra.mrb[0].mxu0 %v150
  %v429 = vpop.f32.mrb[0].mxu0
  %v430 = vadd.f32 %v74, %v429
  %v431 = vpop.f32.mrb[0].mxu0
  %432 = vmatprep.mubr.f32.mxu0 0.0
  %433 = vmatmul.mubr.f32.gmra.mrb[0].mxu0 %v153
  %v434 = vpop.f32.mrb[0].mxu0
  %v435 = vadd.f32 %v74, %v434
  %v436 = vpop.f32.mrb[0].mxu0
  %437 = vmatprep.mubr.f32.mxu0 0.0
  %438 = vmatmul.mubr.f32.gmra.mrb[0].mxu0 %v156
  %v439 = vpop.f32.mrb[0].mxu0
  %v440 = vadd.f32 %v74, %v439
  %v441 = vpop.f32.mrb[0].mxu0
  %442 = vmatprep.mubr.f32.mxu0 0.0
  %443 = vmatmul.mubr.f32.gmra.mrb[0].mxu0 %v159
  %v444 = vpop.f32.mrb[0].mxu0
  %v445 = vadd.f32 %v74, %v444
  %v446 = vpop.f32.mrb[0].mxu0
  %447 = vmatprep.mubr.f32.mxu0 0.0
  %448 = vmatmul.mubr.f32.gmra.mrb[0].mxu0 %v162
  %v449 = vpop.f32.mrb[0].mxu0
  %v450 = vadd.f32 %v74, %v449
  %v451 = vpop.f32.mrb[0].mxu0
  %452 = vmatprep.mubr.f32.mxu0 0.0
  %453 = vmatmul.mubr.f32.gmra.mrb[0].mxu0 %v165
  %v454 = vpop.f32.mrb[0].mxu0
  %v455 = vadd.f32 %v74, %v454
  %v456 = vpop.f32.mrb[0].mxu0
  %457 = vmatprep.mubr.f32.mxu0 0.0
  %458 = vmatmul.mubr.f32.gmra.mrb[0].mxu0 %v168
  %v459 = vpop.f32.mrb[0].mxu0
  %v460 = vadd.f32 %v74, %v459
  %v461 = vpop.f32.mrb[0].mxu0
  %462 = vmatprep.mubr.f32.mxu0 0.0
  %463 = vmatmul.mubr.f32.gmra.mrb[0].mxu0 %v171
  %v464 = vpop.f32.mrb[0].mxu0
  %v465 = vadd.f32 %v74, %v464
  %v466 = vpop.f32.mrb[0].mxu0
  %467 = vmatprep.mubr.f32.mxu0 0.0
  %468 = vmatmul.mubr.f32.gmra.mrb[0].mxu0 %v174
  %v469 = vpop.f32.mrb[0].mxu0
  %v470 = vadd.f32 %v74, %v469
  %v471 = vpop.f32.mrb[0].mxu0
  %472 = vmatprep.mubr.f32.mxu0 0.0
  %473 = vmatmul.mubr.f32.gmra.mrb[0].mxu0 %v177
  %v474 = vpop.f32.mrb[0].mxu0
  %v475 = vadd.f32 %v74, %v474
  %v476 = vpop.f32.mrb[0].mxu0
  %477 = vmatprep.mubr.f32.mxu0 0.0
  %478 = vmatmul.mubr.f32.gmra.mrb[0].mxu0 %v180
  %v479 = vpop.f32.mrb[0].mxu0
  %v480 = vadd.f32 %v74, %v479
  %v481 = vpop.f32.mrb[0].mxu0
  %482 = vmatprep.mubr.f32.mxu0 0.0
  %483 = vmatmul.mubr.f32.gmra.mrb[0].mxu0 %v183
  %v484 = vpop.f32.mrb[0].mxu0
  %v485 = vadd.f32 %v74, %v484
  %v486 = vpop.f32.mrb[0].mxu0
  %487 = vmatprep.mubr.f32.mxu0 0.0
  %488 = vmatmul.mubr.f32.gmra.mrb[0].mxu0 %v186
  %v489 = vpop.f32.mrb[0].mxu0
  %v490 = vadd.f32 %v74, %v489
  %v491 = vpop.f32.mrb[0].mxu0
  %492 = vmatprep.mubr.f32.mxu0 0.0
  %493 = vmatmul.mubr.f32.gmra.mrb[0].mxu0 %v189
  %v494 = vpop.f32.mrb[0].mxu0
  %v495 = vadd.f32 %v74, %v494
  %v496 = vpop.f32.mrb[0].mxu0
  %497 = vmatprep.mubr.f32.mxu0 0.0
  %498 = vmatmul.mubr.f32.gmra.mrb[0].mxu0 %v192
  %v499 = vpop.f32.mrb[0].mxu0
  %v500 = vadd.f32 %v74, %v499
  %v501 = vpop.f32.mrb[0].mxu0
  %502 = vmatprep.mubr.f32.mxu0 0.0
  %503 = vmatmul.mubr.f32.gmra.mrb[0].mxu0 %v195
  %v504 = vpop.f32.mrb[0].mxu0
  %v505 = vadd.f32 %v74, %v504
  %v506 = vpop.f32.mrb[0].mxu0
  %507 = vmatprep.mubr.f32.mxu0 0.0
  %508 = vmatmul.mubr.f32.gmra.mrb[0].mxu0 %v198
  %v509 = vpop.f32.mrb[0].mxu0
  %v510 = vadd.f32 %v74, %v509
  %v511 = vpop.f32.mrb[0].mxu0
  %512 = vmatprep.mubr.f32.mxu0 0.0
  %513 = vmatmul.mubr.f32.gmra.mrb[0].mxu0 %v201
  %v514 = vpop.f32.mrb[0].mxu0
  %v515 = vadd.f32 %v74, %v514
  %v516 = vpop.f32.mrb[0].mxu0
  %517 = vmatprep.mubr.f32.mxu0 0.0
  %518 = vmatmul.mubr.f32.gmra.mrb[0].mxu0 %v204
  %v519 = vpop.f32.mrb[0].mxu0
  %v520 = vadd.f32 %v74, %v519
  %v521 = vpop.f32.mrb[0].mxu0
  %522 = vmatprep.mubr.f32.mxu0 0.0
  %523 = vmatmul.mubr.f32.gmra.mrb[0].mxu0 %v207
  %v524 = vpop.f32.mrb[0].mxu0
  %v525 = vadd.f32 %v74, %v524
  %v526 = vpop.f32.mrb[0].mxu0
  %527 = vmatprep.mubr.f32.mxu0 0.0
  %528 = vmatmul.mubr.f32.gmra.mrb[0].mxu0 %v210
  %v529 = vpop.f32.mrb[0].mxu0
  %v530 = vadd.f32 %v74, %v529
  %v531 = vpop.f32.mrb[0].mxu0
  %532 = vmatprep.mubr.f32.mxu0 0.0
  %533 = vmatmul.mubr.f32.gmra.mrb[0].mxu0 %v213
  %v534 = vpop.f32.mrb[0].mxu0
  %v535 = vadd.f32 %v74, %v534
  %v536 = vpop.f32.mrb[0].mxu0
  %537 = vmatprep.mubr.f32.mxu0 0.0
  %538 = vmatmul.mubr.f32.gmra.mrb[0].mxu0 %v216
  %v539 = vpop.f32.mrb[0].mxu0
  %v540 = vadd.f32 %v74, %v539
  %v541 = vpop.f32.mrb[0].mxu0
  %542 = vmatprep.mubr.f32.mxu0 0.0
  %543 = vmatmul.mubr.f32.gmra.mrb[0].mxu0 %v219
  %v544 = vpop.f32.mrb[0].mxu0
  %v545 = vadd.f32 %v74, %v544
  %v546 = vpop.f32.mrb[0].mxu0
  %547 = vmatprep.mubr.f32.mxu0 0.0
  %548 = vmatmul.mubr.f32.gmra.mrb[0].mxu0 %v222
  %v549 = vpop.f32.mrb[0].mxu0
  %v550 = vadd.f32 %v74, %v549
  %v551 = vpop.f32.mrb[0].mxu0
  %552 = vmatprep.mubr.f32.mxu0 0.0
  %553 = vmatmul.mubr.f32.gmra.mrb[0].mxu0 %v225
  %v554 = vpop.f32.mrb[0].mxu0
  %v555 = vadd.f32 %v74, %v554
  %v556 = vpop.f32.mrb[0].mxu0
  %557 = vmatprep.mubr.f32.mxu0 0.0
  %558 = vmatmul.mubr.f32.gmra.mrb[0].mxu0 %v228
  %v559 = vpop.f32.mrb[0].mxu0
  %v560 = vadd.f32 %v74, %v559
  %v561 = vpop.f32.mrb[0].mxu0
  %562 = vmatprep.mubr.f32.mxu0 0.0
  %563 = vmatmul.mubr.f32.gmra.mrb[0].mxu0 %v231
  %v564 = vpop.f32.mrb[0].mxu0
  %v565 = vadd.f32 %v74, %v564
  %v566 = vpop.f32.mrb[0].mxu0
  %567 = vmatprep.mubr.f32.mxu0 0.0
  %568 = vmatmul.mubr.f32.gmra.mrb[0].mxu0 %v234
  %v569 = vpop.f32.mrb[0].mxu0
  %v570 = vadd.f32 %v74, %v569
  %v571 = vpop.f32.mrb[0].mxu0
  %572 = vmatprep.mubr.f32.mxu0 0.0
  %573 = vmatmul.mubr.f32.gmra.mrb[0].mxu0 %v237
  %v574 = vpop.f32.mrb[0].mxu0
  %v575 = vadd.f32 %v74, %v574
  %v576 = vpop.f32.mrb[0].mxu0
  %577 = vdwg.mxu0
  %578 = vst [vmem:[%s3] sm:$0xff] %v310
  %579 = vst [vmem:[%s3 + $0x8] sm:$0xff] %v315
  %580 = vst [vmem:[%s3 + $0x10] sm:$0xff] %v320
  %581 = vst [vmem:[%s3 + $0x18] sm:$0xff] %v325
  %582 = vst [vmem:[%s3 + $0x20] sm:$0xff] %v330
  %583 = vst [vmem:[%s3 + $0x28] sm:$0xff] %v335
  %584 = vst [vmem:[%s3 + $0x30] sm:$0xff] %v340
  %585 = vst [vmem:[%s3 + $0x38] sm:$0xff] %v345
  %586 = vst [vmem:[%s3 + $0x40] sm:$0xff] %v350
  %587 = vst [vmem:[%s3 + $0x48] sm:$0xff] %v355
  %588 = vst [vmem:[%s3 + $0x50] sm:$0xff] %v360
  %589 = vst [vmem:[%s3 + $0x58] sm:$0xff] %v365
  %590 = vst [vmem:[%s3 + $0x60] sm:$0xff] %v370
  %591 = vst [vmem:[%s3 + $0x68] sm:$0xff] %v375
  %592 = vst [vmem:[%s3 + $0x70] sm:$0xff] %v380
  %593 = vst [vmem:[%s3 + $0x78] sm:$0xff] %v385
  %594 = vst [vmem:[%s3 + $0x80] sm:$0xff] %v390
  %595 = vst [vmem:[%s3 + $0x88] sm:$0xff] %v395
  %596 = vst [vmem:[%s3 + $0x90] sm:$0xff] %v400
  %597 = vst [vmem:[%s3 + $0x98] sm:$0xff] %v405
  %598 = vst [vmem:[%s3 + $0xa0] sm:$0xff] %v410
  %599 = vst [vmem:[%s3 + $0xa8] sm:$0xff] %v415
  %600 = vst [vmem:[%s3 + $0xb0] sm:$0xff] %v420
  %601 = vst [vmem:[%s3 + $0xb8] sm:$0xff] %v425
  %602 = vst [vmem:[%s3 + $0xc0] sm:$0xff] %v430
  %603 = vst [vmem:[%s3 + $0xc8] sm:$0xff] %v435
  %604 = vst [vmem:[%s3 + $0xd0] sm:$0xff] %v440
  %605 = vst [vmem:[%s3 + $0xd8] sm:$0xff] %v445
  %606 = vst [vmem:[%s3 + $0xe0] sm:$0xff] %v450
  %607 = vst [vmem:[%s3 + $0xe8] sm:$0xff] %v455
  %608 = vst [vmem:[%s3 + $0xf0] sm:$0xff] %v460
  %609 = vst [vmem:[%s3 + $0xf8] sm:$0xff] %v465
  %610 = vst [vmem:[%s3 + $0x100] sm:$0xff] %v470
  %611 = vst [vmem:[%s3 + $0x108] sm:$0xff] %v475
  %612 = vst [vmem:[%s3 + $0x110] sm:$0xff] %v480
  %613 = vst [vmem:[%s3 + $0x118] sm:$0xff] %v485
  %614 = vst [vmem:[%s3 + $0x120] sm:$0xff] %v490
  %615 = vst [vmem:[%s3 + $0x128] sm:$0xff] %v495
  %616 = vst [vmem:[%s3 + $0x130] sm:$0xff] %v500
  %617 = vst [vmem:[%s3 + $0x138] sm:$0xff] %v505
  %618 = vst [vmem:[%s3 + $0x140] sm:$0xff] %v510
  %619 = vst [vmem:[%s3 + $0x148] sm:$0xff] %v515
  %620 = vst [vmem:[%s3 + $0x150] sm:$0xff] %v520
  %621 = vst [vmem:[%s3 + $0x158] sm:$0xff] %v525
  %622 = vst [vmem:[%s3 + $0x160] sm:$0xff] %v530
  %623 = vst [vmem:[%s3 + $0x168] sm:$0xff] %v535
  %624 = vst [vmem:[%s3 + $0x170] sm:$0xff] %v540
  %625 = vst [vmem:[%s3 + $0x178] sm:$0xff] %v545
  %626 = vst [vmem:[%s3 + $0x180] sm:$0xff] %v550
  %627 = vst [vmem:[%s3 + $0x188] sm:$0xff] %v555
  %628 = vst [vmem:[%s3 + $0x190] sm:$0xff] %v560
  %629 = vst [vmem:[%s3 + $0x198] sm:$0xff] %v565
  %630 = vst [vmem:[%s3 + $0x1a0] sm:$0xff] %v570
  %631 = vst [vmem:[%s3 + $0x1a8] sm:$0xff] %v575
  // Predicated region
  $region14: #{upsample3d_conv.8} parent=0 // pred_check
    _
  $region15: #{upsample3d_conv.8} parent=0 // pred_check_branch
    %633 = sbr.rel (0) target = $region17
  $region16: #{upsample3d_conv.8} parent=0 // pred_region
    _
  $region17: #{upsample3d_conv.8} parent=0 // pred_fallthru
    _
  // Predicated region
  $region18: #{upsample3d_conv.8} parent=0 // pred_check
    _
  $region19: #{upsample3d_conv.8} parent=0 // pred_check_branch
    %635 = sbr.rel (0) target = $region21
  $region20: #{upsample3d_conv.8} parent=0 // pred_region
    _
  $region21: #{upsample3d_conv.8} parent=0 // pred_fallthru
    _

// kernel: upsample3d_conv.9
$region0: #{upsample3d_conv.9}
  #allocation0 [shape = 'u32[]', space=smem, size = 0x4, offset = 0x4, fixed_abs, tag = 'smem constant byte address 0x4 - core index']
  #allocation1 [shape = 'u32[144,128]{1,0:T(1,128)}', space=vmem, size = 0x12000, scoped, tag = 'internal scratch']
  %s0 = inlined_call_operand.vmem [shape: f32[360,8], index: 0, kind: input, shape index: {}]
  %s1 = inlined_call_operand.vmem [shape: f32[8,128], index: 1, kind: input, shape index: {}]
  %s2 = inlined_call_operand.vmem [shape: f32[1,128], index: 2, kind: input, shape index: {}]
  %s3 = inlined_call_operand.vmem [shape: f32[360,128], index: 3, kind: output, shape index: {}]
  %s4 = sld [smem:[#allocation0]]
  $region22: #{upsample3d_conv.9} parent=0
    _
  %s6 = ssub.s32 1, %s4
  %s7 = scalar_select 0, %s6, %s4
  // Predicated region
  $region2: #{upsample3d_conv.9} parent=0 // pred_check
    _
  $region3: #{upsample3d_conv.9} parent=0 // pred_check_branch
    %9 = sbr.rel (0) target = $region5
  $region4: #{upsample3d_conv.9} parent=0 // pred_region
    _
  $region5: #{upsample3d_conv.9} parent=0 // pred_fallthru
    _
  // Predicated region
  $region6: #{upsample3d_conv.9} parent=0 // pred_check
    _
  $region7: #{upsample3d_conv.9} parent=0 // pred_check_branch
    %11 = sbr.rel (0) target = $region9
  $region8: #{upsample3d_conv.9} parent=0 // pred_region
    _
  $region9: #{upsample3d_conv.9} parent=0 // pred_fallthru
    _
  // Predicated region
  $region10: #{upsample3d_conv.9} parent=0 // pred_check
    _
  $region11: #{upsample3d_conv.9} parent=0 // pred_check_branch
    %13 = sbr.rel (0) target = $region13
  $region12: #{upsample3d_conv.9} parent=0 // pred_region
    _
  $region13: #{upsample3d_conv.9} parent=0 // pred_fallthru
    _
  %v14 = vld [vmem:[%s0] sm:$0xff]
  %v15 = vld [vmem:[%s0 + $0x8] sm:$0xff]
  %v16 = vld [vmem:[%s0 + $0x10] sm:$0xff]
  %v17 = vld [vmem:[%s0 + $0x18] sm:$0xff]
  %v18 = vld [vmem:[%s0 + $0x20] sm:$0xff]
  %v19 = vld [vmem:[%s0 + $0x28] sm:$0xff]
  %v20 = vld [vmem:[%s0 + $0x30] sm:$0xff]
  %v21 = vld [vmem:[%s0 + $0x38] sm:$0xff]
  %v22 = vld [vmem:[%s0 + $0x40] sm:$0xff]
  %v23 = vld [vmem:[%s0 + $0x48] sm:$0xff]
  %v24 = vld [vmem:[%s0 + $0x50] sm:$0xff]
  %v25 = vld [vmem:[%s0 + $0x58] sm:$0xff]
  %v26 = vld [vmem:[%s0 + $0x60] sm:$0xff]
  %v27 = vld [vmem:[%s0 + $0x68] sm:$0xff]
  %v28 = vld [vmem:[%s0 + $0x70] sm:$0xff]
  %v29 = vld [vmem:[%s0 + $0x78] sm:$0xff]
  %v30 = vld [vmem:[%s0 + $0x80] sm:$0xff]
  %v31 = vld [vmem:[%s0 + $0x88] sm:$0xff]
  %v32 = vld [vmem:[%s0 + $0x90] sm:$0xff]
  %v33 = vld [vmem:[%s0 + $0x98] sm:$0xff]
  %v34 = vld [vmem:[%s0 + $0xa0] sm:$0xff]
  %v35 = vld [vmem:[%s0 + $0xa8] sm:$0xff]
  %v36 = vld [vmem:[%s0 + $0xb0] sm:$0xff]
  %v37 = vld [vmem:[%s0 + $0xb8] sm:$0xff]
  %v38 = vld [vmem:[%s0 + $0xc0] sm:$0xff]
  %v39 = vld [vmem:[%s0 + $0xc8] sm:$0xff]
  %v40 = vld [vmem:[%s0 + $0xd0] sm:$0xff]
  %v41 = vld [vmem:[%s0 + $0xd8] sm:$0xff]
  %v42 = vld [vmem:[%s0 + $0xe0] sm:$0xff]
  %v43 = vld [vmem:[%s0 + $0xe8] sm:$0xff]
  %v44 = vld [vmem:[%s0 + $0xf0] sm:$0xff]
  %v45 = vld [vmem:[%s0 + $0xf8] sm:$0xff]
  %v46 = vld [vmem:[%s0 + $0x100] sm:$0xff]
  %v47 = vld [vmem:[%s0 + $0x108] sm:$0xff]
  %v48 = vld [vmem:[%s0 + $0x110] sm:$0xff]
  %v49 = vld [vmem:[%s0 + $0x118] sm:$0xff]
  %v50 = vld [vmem:[%s0 + $0x120] sm:$0xff]
  %v51 = vld [vmem:[%s0 + $0x128] sm:$0xff]
  %v52 = vld [vmem:[%s0 + $0x130] sm:$0xff]
  %v53 = vld [vmem:[%s0 + $0x138] sm:$0xff]
  %v54 = vld [vmem:[%s0 + $0x140] sm:$0xff]
  %v55 = vld [vmem:[%s0 + $0x148] sm:$0xff]
  %v56 = vld [vmem:[%s0 + $0x150] sm:$0xff]
  %v57 = vld [vmem:[%s0 + $0x158] sm:$0xff]
  %v58 = vld [vmem:[%s0 + $0x160] sm:$0xff]
  %v59 = vld [vmem:[%s1] sm:$0xff]
  %v60 = vld [vmem:[%s2] sm:$0x1]
  %v62 = vlaneseq
  %v63 = vshrl.u32 %v62, 7
  %v64 = vsub.s32 0, %v63
  %v65 = vrot.slane %v60, %v64
  %vm67 = vcmask 64512
  %v69 = vsel %vm67, %v14, 0
  %v72 = vsel %vm67, %v15, 0
  %v75 = vsel %vm67, %v16, 0
  %v78 = vsel %vm67, %v17, 0
  %v81 = vsel %vm67, %v18, 0
  %v84 = vsel %vm67, %v19, 0
  %v87 = vsel %vm67, %v20, 0
  %v90 = vsel %vm67, %v21, 0
  %v93 = vsel %vm67, %v22, 0
  %v96 = vsel %vm67, %v23, 0
  %v99 = vsel %vm67, %v24, 0
  %v102 = vsel %vm67, %v25, 0
  %v105 = vsel %vm67, %v26, 0
  %v108 = vsel %vm67, %v27, 0
  %v111 = vsel %vm67, %v28, 0
  %v114 = vsel %vm67, %v29, 0
  %v117 = vsel %vm67, %v30, 0
  %v120 = vsel %vm67, %v31, 0
  %v123 = vsel %vm67, %v32, 0
  %v126 = vsel %vm67, %v33, 0
  %v129 = vsel %vm67, %v34, 0
  %v132 = vsel %vm67, %v35, 0
  %v135 = vsel %vm67, %v36, 0
  %v138 = vsel %vm67, %v37, 0
  %v141 = vsel %vm67, %v38, 0
  %v144 = vsel %vm67, %v39, 0
  %v147 = vsel %vm67, %v40, 0
  %v150 = vsel %vm67, %v41, 0
  %v153 = vsel %vm67, %v42, 0
  %v156 = vsel %vm67, %v43, 0
  %v159 = vsel %vm67, %v44, 0
  %v162 = vsel %vm67, %v45, 0
  %v165 = vsel %vm67, %v46, 0
  %v168 = vsel %vm67, %v47, 0
  %v171 = vsel %vm67, %v48, 0
  %v174 = vsel %vm67, %v49, 0
  %v177 = vsel %vm67, %v50, 0
  %v180 = vsel %vm67, %v51, 0
  %v183 = vsel %vm67, %v52, 0
  %v186 = vsel %vm67, %v53, 0
  %v189 = vsel %vm67, %v54, 0
  %v192 = vsel %vm67, %v55, 0
  %v195 = vsel %vm67, %v56, 0
  %v198 = vsel %vm67, %v57, 0
  %v201 = vsel %vm67, %v58, 0
  %203 = vmatprep.subr.mxu0 0.0
  %204 = vmatpush1.msra.mxu0 %v59
  %205 = vmatprep.subr.mxu0 0.0
  %206 = vmatpush1.msra.mxu0 0.0
  %207 = vmatprep.subr.mxu0 0.0
  %208 = vmatpush1.msra.mxu0 0.0
  %209 = vmatprep.subr.mxu0 0.0
  %210 = vmatpush1.msra.mxu0 0.0
  %211 = vmatprep.subr.mxu0 0.0
  %212 = vmatpush1.msra.mxu0 0.0
  %213 = vmatprep.subr.mxu0 0.0
  %214 = vmatpush1.msra.mxu0 0.0
  %215 = vmatprep.subr.mxu0 0.0
  %216 = vmatpush1.msra.mxu0 0.0
  %217 = vmatprep.subr.mxu0 0.0
  %218 = vmatpush1.msra.mxu0 0.0
  %219 = vmatprep.subr.mxu0 0.0
  %220 = vmatpush1.msra.mxu0 0.0
  %221 = vmatprep.subr.mxu0 0.0
  %222 = vmatpush1.msra.mxu0 0.0
  %223 = vmatprep.subr.mxu0 0.0
  %224 = vmatpush1.msra.mxu0 0.0
  %225 = vmatprep.subr.mxu0 0.0
  %226 = vmatpush1.msra.mxu0 0.0
  %227 = vmatprep.subr.mxu0 0.0
  %228 = vmatpush1.msra.mxu0 0.0
  %229 = vmatprep.subr.mxu0 0.0
  %230 = vmatpush1.msra.mxu0 0.0
  %231 = vmatprep.subr.mxu0 0.0
  %232 = vmatpush1.msra.mxu0 0.0
  %233 = vmatprep.subr.mxu0 0.0
  %234 = vmatpush1.msra.mxu0 0.0
  %235 = vmatprep.subr.mxu0 0.0
  %236 = vmatpush1.msra.mxu0 0.0
  %237 = vmatprep.subr.mxu0 0.0
  %238 = vmatpush1.msra.mxu0 0.0
  %239 = vmatprep.subr.mxu0 0.0
  %240 = vmatpush1.msra.mxu0 0.0
  %241 = vmatprep.subr.mxu0 0.0
  %242 = vmatpush1.msra.mxu0 0.0
  %243 = vmatprep.subr.mxu0 0.0
  %244 = vmatpush1.msra.mxu0 0.0
  %245 = vmatprep.subr.mxu0 0.0
  %246 = vmatpush1.msra.mxu0 0.0
  %247 = vmatprep.subr.mxu0 0.0
  %248 = vmatpush1.msra.mxu0 0.0
  %249 = vmatprep.subr.mxu0 0.0
  %250 = vmatpush1.msra.mxu0 0.0
  %251 = vmatprep.subr.mxu0 0.0
  %252 = vmatpush1.msra.mxu0 0.0
  %253 = vmatprep.subr.mxu0 0.0
  %254 = vmatpush1.msra.mxu0 0.0
  %255 = vmatprep.subr.mxu0 0.0
  %256 = vmatpush1.msra.mxu0 0.0
  %257 = vmatprep.subr.mxu0 0.0
  %258 = vmatpush1.msra.mxu0 0.0
  %259 = vmatprep.subr.mxu0 0.0
  %260 = vmatpush1.msra.mxu0 0.0
  %261 = vmatprep.subr.mxu0 0.0
  %262 = vmatpush1.msra.mxu0 0.0
  %263 = vmatprep.subr.mxu0 0.0
  %264 = vmatpush1.msra.mxu0 0.0
  %265 = vmatprep.subr.mxu0 0.0
  %266 = vmatpush1.msra.mxu0 0.0
  %267 = vmatprep.mubr.f32.mxu0 0.0
  %268 = vmatmul.mubr.f32.gmra.mrb[0].mxu0 %v69
  %v269 = vpop.f32.mrb[0].mxu0
  %v270 = vadd.f32 %v65, %v269
  %v271 = vpop.f32.mrb[0].mxu0
  %272 = vmatprep.mubr.f32.mxu0 0.0
  %273 = vmatmul.mubr.f32.gmra.mrb[0].mxu0 %v72
  %v274 = vpop.f32.mrb[0].mxu0
  %v275 = vadd.f32 %v65, %v274
  %v276 = vpop.f32.mrb[0].mxu0
  %277 = vmatprep.mubr.f32.mxu0 0.0
  %278 = vmatmul.mubr.f32.gmra.mrb[0].mxu0 %v75
  %v279 = vpop.f32.mrb[0].mxu0
  %v280 = vadd.f32 %v65, %v279
  %v281 = vpop.f32.mrb[0].mxu0
  %282 = vmatprep.mubr.f32.mxu0 0.0
  %283 = vmatmul.mubr.f32.gmra.mrb[0].mxu0 %v78
  %v284 = vpop.f32.mrb[0].mxu0
  %v285 = vadd.f32 %v65, %v284
  %v286 = vpop.f32.mrb[0].mxu0
  %287 = vmatprep.mubr.f32.mxu0 0.0
  %288 = vmatmul.mubr.f32.gmra.mrb[0].mxu0 %v81
  %v289 = vpop.f32.mrb[0].mxu0
  %v290 = vadd.f32 %v65, %v289
  %v291 = vpop.f32.mrb[0].mxu0
  %292 = vmatprep.mubr.f32.mxu0 0.0
  %293 = vmatmul.mubr.f32.gmra.mrb[0].mxu0 %v84
  %v294 = vpop.f32.mrb[0].mxu0
  %v295 = vadd.f32 %v65, %v294
  %v296 = vpop.f32.mrb[0].mxu0
  %297 = vmatprep.mubr.f32.mxu0 0.0
  %298 = vmatmul.mubr.f32.gmra.mrb[0].mxu0 %v87
  %v299 = vpop.f32.mrb[0].mxu0
  %v300 = vadd.f32 %v65, %v299
  %v301 = vpop.f32.mrb[0].mxu0
  %302 = vmatprep.mubr.f32.mxu0 0.0
  %303 = vmatmul.mubr.f32.gmra.mrb[0].mxu0 %v90
  %v304 = vpop.f32.mrb[0].mxu0
  %v305 = vadd.f32 %v65, %v304
  %v306 = vpop.f32.mrb[0].mxu0
  %307 = vmatprep.mubr.f32.mxu0 0.0
  %308 = vmatmul.mubr.f32.gmra.mrb[0].mxu0 %v93
  %v309 = vpop.f32.mrb[0].mxu0
  %v310 = vadd.f32 %v65, %v309
  %v311 = vpop.f32.mrb[0].mxu0
  %312 = vmatprep.mubr.f32.mxu0 0.0
  %313 = vmatmul.mubr.f32.gmra.mrb[0].mxu0 %v96
  %v314 = vpop.f32.mrb[0].mxu0
  %v315 = vadd.f32 %v65, %v314
  %v316 = vpop.f32.mrb[0].mxu0
  %317 = vmatprep.mubr.f32.mxu0 0.0
  %318 = vmatmul.mubr.f32.gmra.mrb[0].mxu0 %v99
  %v319 = vpop.f32.mrb[0].mxu0
  %v320 = vadd.f32 %v65, %v319
  %v321 = vpop.f32.mrb[0].mxu0
  %322 = vmatprep.mubr.f32.mxu0 0.0
  %323 = vmatmul.mubr.f32.gmra.mrb[0].mxu0 %v102
  %v324 = vpop.f32.mrb[0].mxu0
  %v325 = vadd.f32 %v65, %v324
  %v326 = vpop.f32.mrb[0].mxu0
  %327 = vmatprep.mubr.f32.mxu0 0.0
  %328 = vmatmul.mubr.f32.gmra.mrb[0].mxu0 %v105
  %v329 = vpop.f32.mrb[0].mxu0
  %v330 = vadd.f32 %v65, %v329
  %v331 = vpop.f32.mrb[0].mxu0
  %332 = vmatprep.mubr.f32.mxu0 0.0
  %333 = vmatmul.mubr.f32.gmra.mrb[0].mxu0 %v108
  %v334 = vpop.f32.mrb[0].mxu0
  %v335 = vadd.f32 %v65, %v334
  %v336 = vpop.f32.mrb[0].mxu0
  %337 = vmatprep.mubr.f32.mxu0 0.0
  %338 = vmatmul.mubr.f32.gmra.mrb[0].mxu0 %v111
  %v339 = vpop.f32.mrb[0].mxu0
  %v340 = vadd.f32 %v65, %v339
  %v341 = vpop.f32.mrb[0].mxu0
  %342 = vmatprep.mubr.f32.mxu0 0.0
  %343 = vmatmul.mubr.f32.gmra.mrb[0].mxu0 %v114
  %v344 = vpop.f32.mrb[0].mxu0
  %v345 = vadd.f32 %v65, %v344
  %v346 = vpop.f32.mrb[0].mxu0
  %347 = vmatprep.mubr.f32.mxu0 0.0
  %348 = vmatmul.mubr.f32.gmra.mrb[0].mxu0 %v117
  %v349 = vpop.f32.mrb[0].mxu0
  %v350 = vadd.f32 %v65, %v349
  %v351 = vpop.f32.mrb[0].mxu0
  %352 = vmatprep.mubr.f32.mxu0 0.0
  %353 = vmatmul.mubr.f32.gmra.mrb[0].mxu0 %v120
  %v354 = vpop.f32.mrb[0].mxu0
  %v355 = vadd.f32 %v65, %v354
  %v356 = vpop.f32.mrb[0].mxu0
  %357 = vmatprep.mubr.f32.mxu0 0.0
  %358 = vmatmul.mubr.f32.gmra.mrb[0].mxu0 %v123
  %v359 = vpop.f32.mrb[0].mxu0
  %v360 = vadd.f32 %v65, %v359
  %v361 = vpop.f32.mrb[0].mxu0
  %362 = vmatprep.mubr.f32.mxu0 0.0
  %363 = vmatmul.mubr.f32.gmra.mrb[0].mxu0 %v126
  %v364 = vpop.f32.mrb[0].mxu0
  %v365 = vadd.f32 %v65, %v364
  %v366 = vpop.f32.mrb[0].mxu0
  %367 = vmatprep.mubr.f32.mxu0 0.0
  %368 = vmatmul.mubr.f32.gmra.mrb[0].mxu0 %v129
  %v369 = vpop.f32.mrb[0].mxu0
  %v370 = vadd.f32 %v65, %v369
  %v371 = vpop.f32.mrb[0].mxu0
  %372 = vmatprep.mubr.f32.mxu0 0.0
  %373 = vmatmul.mubr.f32.gmra.mrb[0].mxu0 %v132
  %v374 = vpop.f32.mrb[0].mxu0
  %v375 = vadd.f32 %v65, %v374
  %v376 = vpop.f32.mrb[0].mxu0
  %377 = vmatprep.mubr.f32.mxu0 0.0
  %378 = vmatmul.mubr.f32.gmra.mrb[0].mxu0 %v135
  %v379 = vpop.f32.mrb[0].mxu0
  %v380 = vadd.f32 %v65, %v379
  %v381 = vpop.f32.mrb[0].mxu0
  %382 = vmatprep.mubr.f32.mxu0 0.0
  %383 = vmatmul.mubr.f32.gmra.mrb[0].mxu0 %v138
  %v384 = vpop.f32.mrb[0].mxu0
  %v385 = vadd.f32 %v65, %v384
  %v386 = vpop.f32.mrb[0].mxu0
  %387 = vmatprep.mubr.f32.mxu0 0.0
  %388 = vmatmul.mubr.f32.gmra.mrb[0].mxu0 %v141
  %v389 = vpop.f32.mrb[0].mxu0
  %v390 = vadd.f32 %v65, %v389
  %v391 = vpop.f32.mrb[0].mxu0
  %392 = vmatprep.mubr.f32.mxu0 0.0
  %393 = vmatmul.mubr.f32.gmra.mrb[0].mxu0 %v144
  %v394 = vpop.f32.mrb[0].mxu0
  %v395 = vadd.f32 %v65, %v394
  %v396 = vpop.f32.mrb[0].mxu0
  %397 = vmatprep.mubr.f32.mxu0 0.0
  %398 = vmatmul.mubr.f32.gmra.mrb[0].mxu0 %v147
  %v399 = vpop.f32.mrb[0].mxu0
  %v400 = vadd.f32 %v65, %v399
  %v401 = vpop.f32.mrb[0].mxu0
  %402 = vmatprep.mubr.f32.mxu0 0.0
  %403 = vmatmul.mubr.f32.gmra.mrb[0].mxu0 %v150
  %v404 = vpop.f32.mrb[0].mxu0
  %v405 = vadd.f32 %v65, %v404
  %v406 = vpop.f32.mrb[0].mxu0
  %407 = vmatprep.mubr.f32.mxu0 0.0
  %408 = vmatmul.mubr.f32.gmra.mrb[0].mxu0 %v153
  %v409 = vpop.f32.mrb[0].mxu0
  %v410 = vadd.f32 %v65, %v409
  %v411 = vpop.f32.mrb[0].mxu0
  %412 = vmatprep.mubr.f32.mxu0 0.0
  %413 = vmatmul.mubr.f32.gmra.mrb[0].mxu0 %v156
  %v414 = vpop.f32.mrb[0].mxu0
  %v415 = vadd.f32 %v65, %v414
  %v416 = vpop.f32.mrb[0].mxu0
  %417 = vmatprep.mubr.f32.mxu0 0.0
  %418 = vmatmul.mubr.f32.gmra.mrb[0].mxu0 %v159
  %v419 = vpop.f32.mrb[0].mxu0
  %v420 = vadd.f32 %v65, %v419
  %v421 = vpop.f32.mrb[0].mxu0
  %422 = vmatprep.mubr.f32.mxu0 0.0
  %423 = vmatmul.mubr.f32.gmra.mrb[0].mxu0 %v162
  %v424 = vpop.f32.mrb[0].mxu0
  %v425 = vadd.f32 %v65, %v424
  %v426 = vpop.f32.mrb[0].mxu0
  %427 = vmatprep.mubr.f32.mxu0 0.0
  %428 = vmatmul.mubr.f32.gmra.mrb[0].mxu0 %v165
  %v429 = vpop.f32.mrb[0].mxu0
  %v430 = vadd.f32 %v65, %v429
  %v431 = vpop.f32.mrb[0].mxu0
  %432 = vmatprep.mubr.f32.mxu0 0.0
  %433 = vmatmul.mubr.f32.gmra.mrb[0].mxu0 %v168
  %v434 = vpop.f32.mrb[0].mxu0
  %v435 = vadd.f32 %v65, %v434
  %v436 = vpop.f32.mrb[0].mxu0
  %437 = vmatprep.mubr.f32.mxu0 0.0
  %438 = vmatmul.mubr.f32.gmra.mrb[0].mxu0 %v171
  %v439 = vpop.f32.mrb[0].mxu0
  %v440 = vadd.f32 %v65, %v439
  %v441 = vpop.f32.mrb[0].mxu0
  %442 = vmatprep.mubr.f32.mxu0 0.0
  %443 = vmatmul.mubr.f32.gmra.mrb[0].mxu0 %v174
  %v444 = vpop.f32.mrb[0].mxu0
  %v445 = vadd.f32 %v65, %v444
  %v446 = vpop.f32.mrb[0].mxu0
  %447 = vmatprep.mubr.f32.mxu0 0.0
  %448 = vmatmul.mubr.f32.gmra.mrb[0].mxu0 %v177
  %v449 = vpop.f32.mrb[0].mxu0
  %v450 = vadd.f32 %v65, %v449
  %v451 = vpop.f32.mrb[0].mxu0
  %452 = vmatprep.mubr.f32.mxu0 0.0
  %453 = vmatmul.mubr.f32.gmra.mrb[0].mxu0 %v180
  %v454 = vpop.f32.mrb[0].mxu0
  %v455 = vadd.f32 %v65, %v454
  %v456 = vpop.f32.mrb[0].mxu0
  %457 = vmatprep.mubr.f32.mxu0 0.0
  %458 = vmatmul.mubr.f32.gmra.mrb[0].mxu0 %v183
  %v459 = vpop.f32.mrb[0].mxu0
  %v460 = vadd.f32 %v65, %v459
  %v461 = vpop.f32.mrb[0].mxu0
  %462 = vmatprep.mubr.f32.mxu0 0.0
  %463 = vmatmul.mubr.f32.gmra.mrb[0].mxu0 %v186
  %v464 = vpop.f32.mrb[0].mxu0
  %v465 = vadd.f32 %v65, %v464
  %v466 = vpop.f32.mrb[0].mxu0
  %467 = vmatprep.mubr.f32.mxu0 0.0
  %468 = vmatmul.mubr.f32.gmra.mrb[0].mxu0 %v189
  %v469 = vpop.f32.mrb[0].mxu0
  %v470 = vadd.f32 %v65, %v469
  %v471 = vpop.f32.mrb[0].mxu0
  %472 = vmatprep.mubr.f32.mxu0 0.0
  %473 = vmatmul.mubr.f32.gmra.mrb[0].mxu0 %v192
  %v474 = vpop.f32.mrb[0].mxu0
  %v475 = vadd.f32 %v65, %v474
  %v476 = vpop.f32.mrb[0].mxu0
  %477 = vmatprep.mubr.f32.mxu0 0.0
  %478 = vmatmul.mubr.f32.gmra.mrb[0].mxu0 %v195
  %v479 = vpop.f32.mrb[0].mxu0
  %v480 = vadd.f32 %v65, %v479
  %v481 = vpop.f32.mrb[0].mxu0
  %482 = vmatprep.mubr.f32.mxu0 0.0
  %483 = vmatmul.mubr.f32.gmra.mrb[0].mxu0 %v198
  %v484 = vpop.f32.mrb[0].mxu0
  %v485 = vadd.f32 %v65, %v484
  %v486 = vpop.f32.mrb[0].mxu0
  %487 = vmatprep.mubr.f32.mxu0 0.0
  %488 = vmatmul.mubr.f32.gmra.mrb[0].mxu0 %v201
  %v489 = vpop.f32.mrb[0].mxu0
  %v490 = vadd.f32 %v65, %v489
  %v491 = vpop.f32.mrb[0].mxu0
  %492 = vdwg.mxu0
  %493 = vst [vmem:[%s3] sm:$0xff] %v270
  %494 = vst [vmem:[%s3 + $0x8] sm:$0xff] %v275
  %495 = vst [vmem:[%s3 + $0x10] sm:$0xff] %v280
  %496 = vst [vmem:[%s3 + $0x18] sm:$0xff] %v285
  %497 = vst [vmem:[%s3 + $0x20] sm:$0xff] %v290
  %498 = vst [vmem:[%s3 + $0x28] sm:$0xff] %v295
  %499 = vst [vmem:[%s3 + $0x30] sm:$0xff] %v300
  %500 = vst [vmem:[%s3 + $0x38] sm:$0xff] %v305
  %501 = vst [vmem:[%s3 + $0x40] sm:$0xff] %v310
  %502 = vst [vmem:[%s3 + $0x48] sm:$0xff] %v315
  %503 = vst [vmem:[%s3 + $0x50] sm:$0xff] %v320
  %504 = vst [vmem:[%s3 + $0x58] sm:$0xff] %v325
  %505 = vst [vmem:[%s3 + $0x60] sm:$0xff] %v330
  %506 = vst [vmem:[%s3 + $0x68] sm:$0xff] %v335
  %507 = vst [vmem:[%s3 + $0x70] sm:$0xff] %v340
  %508 = vst [vmem:[%s3 + $0x78] sm:$0xff] %v345
  %509 = vst [vmem:[%s3 + $0x80] sm:$0xff] %v350
  %510 = vst [vmem:[%s3 + $0x88] sm:$0xff] %v355
  %511 = vst [vmem:[%s3 + $0x90] sm:$0xff] %v360
  %512 = vst [vmem:[%s3 + $0x98] sm:$0xff] %v365
  %513 = vst [vmem:[%s3 + $0xa0] sm:$0xff] %v370
  %514 = vst [vmem:[%s3 + $0xa8] sm:$0xff] %v375
  %515 = vst [vmem:[%s3 + $0xb0] sm:$0xff] %v380
  %516 = vst [vmem:[%s3 + $0xb8] sm:$0xff] %v385
  %517 = vst [vmem:[%s3 + $0xc0] sm:$0xff] %v390
  %518 = vst [vmem:[%s3 + $0xc8] sm:$0xff] %v395
  %519 = vst [vmem:[%s3 + $0xd0] sm:$0xff] %v400
  %520 = vst [vmem:[%s3 + $0xd8] sm:$0xff] %v405
  %521 = vst [vmem:[%s3 + $0xe0] sm:$0xff] %v410
  %522 = vst [vmem:[%s3 + $0xe8] sm:$0xff] %v415
  %523 = vst [vmem:[%s3 + $0xf0] sm:$0xff] %v420
  %524 = vst [vmem:[%s3 + $0xf8] sm:$0xff] %v425
  %525 = vst [vmem:[%s3 + $0x100] sm:$0xff] %v430
  %526 = vst [vmem:[%s3 + $0x108] sm:$0xff] %v435
  %527 = vst [vmem:[%s3 + $0x110] sm:$0xff] %v440
  %528 = vst [vmem:[%s3 + $0x118] sm:$0xff] %v445
  %529 = vst [vmem:[%s3 + $0x120] sm:$0xff] %v450
  %530 = vst [vmem:[%s3 + $0x128] sm:$0xff] %v455
  %531 = vst [vmem:[%s3 + $0x130] sm:$0xff] %v460
  %532 = vst [vmem:[%s3 + $0x138] sm:$0xff] %v465
  %533 = vst [vmem:[%s3 + $0x140] sm:$0xff] %v470
  %534 = vst [vmem:[%s3 + $0x148] sm:$0xff] %v475
  %535 = vst [vmem:[%s3 + $0x150] sm:$0xff] %v480
  %536 = vst [vmem:[%s3 + $0x158] sm:$0xff] %v485
  %537 = vst [vmem:[%s3 + $0x160] sm:$0xff] %v490
  // Predicated region
  $region14: #{upsample3d_conv.9} parent=0 // pred_check
    _
  $region15: #{upsample3d_conv.9} parent=0 // pred_check_branch
    %539 = sbr.rel (0) target = $region17
  $region16: #{upsample3d_conv.9} parent=0 // pred_region
    _
  $region17: #{upsample3d_conv.9} parent=0 // pred_fallthru
    _
  // Predicated region
  $region18: #{upsample3d_conv.9} parent=0 // pred_check
    _
  $region19: #{upsample3d_conv.9} parent=0 // pred_check_branch
    %541 = sbr.rel (0) target = $region21
  $region20: #{upsample3d_conv.9} parent=0 // pred_region
    _
  $region21: #{upsample3d_conv.9} parent=0 // pred_fallthru
    _

// kernel: upsample3d_conv.11
$region0: #{upsample3d_conv.11}
  #allocation0 [shape = 'u32[]', space=smem, size = 0x4, offset = 0x4, fixed_abs, tag = 'smem constant byte address 0x4 - core index']
  #allocation1 [shape = 'u32[144,128]{1,0:T(1,128)}', space=vmem, size = 0x12000, scoped, tag = 'internal scratch']
  %s0 = inlined_call_operand.vmem [shape: f32[304,16], index: 0, kind: input, shape index: {}]
  %s1 = inlined_call_operand.vmem [shape: f32[16,128], index: 1, kind: input, shape index: {}]
  %s2 = inlined_call_operand.vmem [shape: f32[1,128], index: 2, kind: input, shape index: {}]
  %s3 = inlined_call_operand.vmem [shape: f32[304,128], index: 3, kind: output, shape index: {}]
  %s4 = sld [smem:[#allocation0]]
  $region22: #{upsample3d_conv.11} parent=0
    _
  %s6 = ssub.s32 1, %s4
  %s7 = scalar_select 0, %s6, %s4
  // Predicated region
  $region2: #{upsample3d_conv.11} parent=0 // pred_check
    _
  $region3: #{upsample3d_conv.11} parent=0 // pred_check_branch
    %9 = sbr.rel (0) target = $region5
  $region4: #{upsample3d_conv.11} parent=0 // pred_region
    _
  $region5: #{upsample3d_conv.11} parent=0 // pred_fallthru
    _
  // Predicated region
  $region6: #{upsample3d_conv.11} parent=0 // pred_check
    _
  $region7: #{upsample3d_conv.11} parent=0 // pred_check_branch
    %11 = sbr.rel (0) target = $region9
  $region8: #{upsample3d_conv.11} parent=0 // pred_region
    _
  $region9: #{upsample3d_conv.11} parent=0 // pred_fallthru
    _
  // Predicated region
  $region10: #{upsample3d_conv.11} parent=0 // pred_check
    _
  $region11: #{upsample3d_conv.11} parent=0 // pred_check_branch
    %13 = sbr.rel (0) target = $region13
  $region12: #{upsample3d_conv.11} parent=0 // pred_region
    _
  $region13: #{upsample3d_conv.11} parent=0 // pred_fallthru
    _
  %v14 = vld [vmem:[%s0] sm:$0xff]
  %v15 = vld [vmem:[%s0 + $0x8] sm:$0xff]
  %v16 = vld [vmem:[%s0 + $0x10] sm:$0xff]
  %v17 = vld [vmem:[%s0 + $0x18] sm:$0xff]
  %v18 = vld [vmem:[%s0 + $0x20] sm:$0xff]
  %v19 = vld [vmem:[%s0 + $0x28] sm:$0xff]
  %v20 = vld [vmem:[%s0 + $0x30] sm:$0xff]
  %v21 = vld [vmem:[%s0 + $0x38] sm:$0xff]
  %v22 = vld [vmem:[%s0 + $0x40] sm:$0xff]
  %v23 = vld [vmem:[%s0 + $0x48] sm:$0xff]
  %v24 = vld [vmem:[%s0 + $0x50] sm:$0xff]
  %v25 = vld [vmem:[%s0 + $0x58] sm:$0xff]
  %v26 = vld [vmem:[%s0 + $0x60] sm:$0xff]
  %v27 = vld [vmem:[%s0 + $0x68] sm:$0xff]
  %v28 = vld [vmem:[%s0 + $0x70] sm:$0xff]
  %v29 = vld [vmem:[%s0 + $0x78] sm:$0xff]
  %v30 = vld [vmem:[%s0 + $0x80] sm:$0xff]
  %v31 = vld [vmem:[%s0 + $0x88] sm:$0xff]
  %v32 = vld [vmem:[%s0 + $0x90] sm:$0xff]
  %v33 = vld [vmem:[%s0 + $0x98] sm:$0xff]
  %v34 = vld [vmem:[%s0 + $0xa0] sm:$0xff]
  %v35 = vld [vmem:[%s0 + $0xa8] sm:$0xff]
  %v36 = vld [vmem:[%s0 + $0xb0] sm:$0xff]
  %v37 = vld [vmem:[%s0 + $0xb8] sm:$0xff]
  %v38 = vld [vmem:[%s0 + $0xc0] sm:$0xff]
  %v39 = vld [vmem:[%s0 + $0xc8] sm:$0xff]
  %v40 = vld [vmem:[%s0 + $0xd0] sm:$0xff]
  %v41 = vld [vmem:[%s0 + $0xd8] sm:$0xff]
  %v42 = vld [vmem:[%s0 + $0xe0] sm:$0xff]
  %v43 = vld [vmem:[%s0 + $0xe8] sm:$0xff]
  %v44 = vld [vmem:[%s0 + $0xf0] sm:$0xff]
  %v45 = vld [vmem:[%s0 + $0xf8] sm:$0xff]
  %v46 = vld [vmem:[%s0 + $0x100] sm:$0xff]
  %v47 = vld [vmem:[%s0 + $0x108] sm:$0xff]
  %v48 = vld [vmem:[%s0 + $0x110] sm:$0xff]
  %v49 = vld [vmem:[%s0 + $0x118] sm:$0xff]
  %v50 = vld [vmem:[%s0 + $0x120] sm:$0xff]
  %v51 = vld [vmem:[%s0 + $0x128] sm:$0xff]
  %v52 = vld [vmem:[%s1] sm:$0xff]
  %v53 = vld [vmem:[%s1 + $0x8] sm:$0xff]
  %v54 = vld [vmem:[%s2] sm:$0x1]
  %v56 = vlaneseq
  %v57 = vshrl.u32 %v56, 7
  %v58 = vsub.s32 0, %v57
  %v59 = vrot.slane %v54, %v58
  %vm61 = vcmask 130048
  %v63 = vsel %vm61, %v14, 0
  %v66 = vsel %vm61, %v15, 0
  %v69 = vsel %vm61, %v16, 0
  %v72 = vsel %vm61, %v17, 0
  %v75 = vsel %vm61, %v18, 0
  %v78 = vsel %vm61, %v19, 0
  %v81 = vsel %vm61, %v20, 0
  %v84 = vsel %vm61, %v21, 0
  %v87 = vsel %vm61, %v22, 0
  %v90 = vsel %vm61, %v23, 0
  %v93 = vsel %vm61, %v24, 0
  %v96 = vsel %vm61, %v25, 0
  %v99 = vsel %vm61, %v26, 0
  %v102 = vsel %vm61, %v27, 0
  %v105 = vsel %vm61, %v28, 0
  %v108 = vsel %vm61, %v29, 0
  %v111 = vsel %vm61, %v30, 0
  %v114 = vsel %vm61, %v31, 0
  %v117 = vsel %vm61, %v32, 0
  %v120 = vsel %vm61, %v33, 0
  %v123 = vsel %vm61, %v34, 0
  %v126 = vsel %vm61, %v35, 0
  %v129 = vsel %vm61, %v36, 0
  %v132 = vsel %vm61, %v37, 0
  %v135 = vsel %vm61, %v38, 0
  %v138 = vsel %vm61, %v39, 0
  %v141 = vsel %vm61, %v40, 0
  %v144 = vsel %vm61, %v41, 0
  %v147 = vsel %vm61, %v42, 0
  %v150 = vsel %vm61, %v43, 0
  %v153 = vsel %vm61, %v44, 0
  %v156 = vsel %vm61, %v45, 0
  %v159 = vsel %vm61, %v46, 0
  %v162 = vsel %vm61, %v47, 0
  %v165 = vsel %vm61, %v48, 0
  %v168 = vsel %vm61, %v49, 0
  %v171 = vsel %vm61, %v50, 0
  %v174 = vsel %vm61, %v51, 0
  %176 = vmatprep.subr.mxu0 0.0
  %177 = vmatpush1.msra.mxu0 %v52
  %178 = vmatprep.subr.mxu0 0.0
  %179 = vmatpush1.msra.mxu0 %v53
  %180 = vmatprep.subr.mxu0 0.0
  %181 = vmatpush1.msra.mxu0 0.0
  %182 = vmatprep.subr.mxu0 0.0
  %183 = vmatpush1.msra.mxu0 0.0
  %184 = vmatprep.subr.mxu0 0.0
  %185 = vmatpush1.msra.mxu0 0.0
  %186 = vmatprep.subr.mxu0 0.0
  %187 = vmatpush1.msra.mxu0 0.0
  %188 = vmatprep.subr.mxu0 0.0
  %189 = vmatpush1.msra.mxu0 0.0
  %190 = vmatprep.subr.mxu0 0.0
  %191 = vmatpush1.msra.mxu0 0.0
  %192 = vmatprep.subr.mxu0 0.0
  %193 = vmatpush1.msra.mxu0 0.0
  %194 = vmatprep.subr.mxu0 0.0
  %195 = vmatpush1.msra.mxu0 0.0
  %196 = vmatprep.subr.mxu0 0.0
  %197 = vmatpush1.msra.mxu0 0.0
  %198 = vmatprep.subr.mxu0 0.0
  %199 = vmatpush1.msra.mxu0 0.0
  %200 = vmatprep.subr.mxu0 0.0
  %201 = vmatpush1.msra.mxu0 0.0
  %202 = vmatprep.subr.mxu0 0.0
  %203 = vmatpush1.msra.mxu0 0.0
  %204 = vmatprep.subr.mxu0 0.0
  %205 = vmatpush1.msra.mxu0 0.0
  %206 = vmatprep.subr.mxu0 0.0
  %207 = vmatpush1.msra.mxu0 0.0
  %208 = vmatprep.subr.mxu0 0.0
  %209 = vmatpush1.msra.mxu0 0.0
  %210 = vmatprep.subr.mxu0 0.0
  %211 = vmatpush1.msra.mxu0 0.0
  %212 = vmatprep.subr.mxu0 0.0
  %213 = vmatpush1.msra.mxu0 0.0
  %214 = vmatprep.subr.mxu0 0.0
  %215 = vmatpush1.msra.mxu0 0.0
  %216 = vmatprep.subr.mxu0 0.0
  %217 = vmatpush1.msra.mxu0 0.0
  %218 = vmatprep.subr.mxu0 0.0
  %219 = vmatpush1.msra.mxu0 0.0
  %220 = vmatprep.subr.mxu0 0.0
  %221 = vmatpush1.msra.mxu0 0.0
  %222 = vmatprep.subr.mxu0 0.0
  %223 = vmatpush1.msra.mxu0 0.0
  %224 = vmatprep.subr.mxu0 0.0
  %225 = vmatpush1.msra.mxu0 0.0
  %226 = vmatprep.subr.mxu0 0.0
  %227 = vmatpush1.msra.mxu0 0.0
  %228 = vmatprep.subr.mxu0 0.0
  %229 = vmatpush1.msra.mxu0 0.0
  %230 = vmatprep.subr.mxu0 0.0
  %231 = vmatpush1.msra.mxu0 0.0
  %232 = vmatprep.subr.mxu0 0.0
  %233 = vmatpush1.msra.mxu0 0.0
  %234 = vmatprep.subr.mxu0 0.0
  %235 = vmatpush1.msra.mxu0 0.0
  %236 = vmatprep.subr.mxu0 0.0
  %237 = vmatpush1.msra.mxu0 0.0
  %238 = vmatprep.subr.mxu0 0.0
  %239 = vmatpush1.msra.mxu0 0.0
  %240 = vmatprep.mubr.f32.mxu0 0.0
  %241 = vmatmul.mubr.f32.gmra.mrb[0].mxu0 %v63
  %v242 = vpop.f32.mrb[0].mxu0
  %v243 = vadd.f32 %v59, %v242
  %v244 = vpop.f32.mrb[0].mxu0
  %245 = vmatprep.mubr.f32.mxu0 0.0
  %246 = vmatmul.mubr.f32.gmra.mrb[0].mxu0 %v66
  %v247 = vpop.f32.mrb[0].mxu0
  %v248 = vadd.f32 %v59, %v247
  %v249 = vpop.f32.mrb[0].mxu0
  %250 = vmatprep.mubr.f32.mxu0 0.0
  %251 = vmatmul.mubr.f32.gmra.mrb[0].mxu0 %v69
  %v252 = vpop.f32.mrb[0].mxu0
  %v253 = vadd.f32 %v59, %v252
  %v254 = vpop.f32.mrb[0].mxu0
  %255 = vmatprep.mubr.f32.mxu0 0.0
  %256 = vmatmul.mubr.f32.gmra.mrb[0].mxu0 %v72
  %v257 = vpop.f32.mrb[0].mxu0
  %v258 = vadd.f32 %v59, %v257
  %v259 = vpop.f32.mrb[0].mxu0
  %260 = vmatprep.mubr.f32.mxu0 0.0
  %261 = vmatmul.mubr.f32.gmra.mrb[0].mxu0 %v75
  %v262 = vpop.f32.mrb[0].mxu0
  %v263 = vadd.f32 %v59, %v262
  %v264 = vpop.f32.mrb[0].mxu0
  %265 = vmatprep.mubr.f32.mxu0 0.0
  %266 = vmatmul.mubr.f32.gmra.mrb[0].mxu0 %v78
  %v267 = vpop.f32.mrb[0].mxu0
  %v268 = vadd.f32 %v59, %v267
  %v269 = vpop.f32.mrb[0].mxu0
  %270 = vmatprep.mubr.f32.mxu0 0.0
  %271 = vmatmul.mubr.f32.gmra.mrb[0].mxu0 %v81
  %v272 = vpop.f32.mrb[0].mxu0
  %v273 = vadd.f32 %v59, %v272
  %v274 = vpop.f32.mrb[0].mxu0
  %275 = vmatprep.mubr.f32.mxu0 0.0
  %276 = vmatmul.mubr.f32.gmra.mrb[0].mxu0 %v84
  %v277 = vpop.f32.mrb[0].mxu0
  %v278 = vadd.f32 %v59, %v277
  %v279 = vpop.f32.mrb[0].mxu0
  %280 = vmatprep.mubr.f32.mxu0 0.0
  %281 = vmatmul.mubr.f32.gmra.mrb[0].mxu0 %v87
  %v282 = vpop.f32.mrb[0].mxu0
  %v283 = vadd.f32 %v59, %v282
  %v284 = vpop.f32.mrb[0].mxu0
  %285 = vmatprep.mubr.f32.mxu0 0.0
  %286 = vmatmul.mubr.f32.gmra.mrb[0].mxu0 %v90
  %v287 = vpop.f32.mrb[0].mxu0
  %v288 = vadd.f32 %v59, %v287
  %v289 = vpop.f32.mrb[0].mxu0
  %290 = vmatprep.mubr.f32.mxu0 0.0
  %291 = vmatmul.mubr.f32.gmra.mrb[0].mxu0 %v93
  %v292 = vpop.f32.mrb[0].mxu0
  %v293 = vadd.f32 %v59, %v292
  %v294 = vpop.f32.mrb[0].mxu0
  %295 = vmatprep.mubr.f32.mxu0 0.0
  %296 = vmatmul.mubr.f32.gmra.mrb[0].mxu0 %v96
  %v297 = vpop.f32.mrb[0].mxu0
  %v298 = vadd.f32 %v59, %v297
  %v299 = vpop.f32.mrb[0].mxu0
  %300 = vmatprep.mubr.f32.mxu0 0.0
  %301 = vmatmul.mubr.f32.gmra.mrb[0].mxu0 %v99
  %v302 = vpop.f32.mrb[0].mxu0
  %v303 = vadd.f32 %v59, %v302
  %v304 = vpop.f32.mrb[0].mxu0
  %305 = vmatprep.mubr.f32.mxu0 0.0
  %306 = vmatmul.mubr.f32.gmra.mrb[0].mxu0 %v102
  %v307 = vpop.f32.mrb[0].mxu0
  %v308 = vadd.f32 %v59, %v307
  %v309 = vpop.f32.mrb[0].mxu0
  %310 = vmatprep.mubr.f32.mxu0 0.0
  %311 = vmatmul.mubr.f32.gmra.mrb[0].mxu0 %v105
  %v312 = vpop.f32.mrb[0].mxu0
  %v313 = vadd.f32 %v59, %v312
  %v314 = vpop.f32.mrb[0].mxu0
  %315 = vmatprep.mubr.f32.mxu0 0.0
  %316 = vmatmul.mubr.f32.gmra.mrb[0].mxu0 %v108
  %v317 = vpop.f32.mrb[0].mxu0
  %v318 = vadd.f32 %v59, %v317
  %v319 = vpop.f32.mrb[0].mxu0
  %320 = vmatprep.mubr.f32.mxu0 0.0
  %321 = vmatmul.mubr.f32.gmra.mrb[0].mxu0 %v111
  %v322 = vpop.f32.mrb[0].mxu0
  %v323 = vadd.f32 %v59, %v322
  %v324 = vpop.f32.mrb[0].mxu0
  %325 = vmatprep.mubr.f32.mxu0 0.0
  %326 = vmatmul.mubr.f32.gmra.mrb[0].mxu0 %v114
  %v327 = vpop.f32.mrb[0].mxu0
  %v328 = vadd.f32 %v59, %v327
  %v329 = vpop.f32.mrb[0].mxu0
  %330 = vmatprep.mubr.f32.mxu0 0.0
  %331 = vmatmul.mubr.f32.gmra.mrb[0].mxu0 %v117
  %v332 = vpop.f32.mrb[0].mxu0
  %v333 = vadd.f32 %v59, %v332
  %v334 = vpop.f32.mrb[0].mxu0
  %335 = vmatprep.mubr.f32.mxu0 0.0
  %336 = vmatmul.mubr.f32.gmra.mrb[0].mxu0 %v120
  %v337 = vpop.f32.mrb[0].mxu0
  %v338 = vadd.f32 %v59, %v337
  %v339 = vpop.f32.mrb[0].mxu0
  %340 = vmatprep.mubr.f32.mxu0 0.0
  %341 = vmatmul.mubr.f32.gmra.mrb[0].mxu0 %v123
  %v342 = vpop.f32.mrb[0].mxu0
  %v343 = vadd.f32 %v59, %v342
  %v344 = vpop.f32.mrb[0].mxu0
  %345 = vmatprep.mubr.f32.mxu0 0.0
  %346 = vmatmul.mubr.f32.gmra.mrb[0].mxu0 %v126
  %v347 = vpop.f32.mrb[0].mxu0
  %v348 = vadd.f32 %v59, %v347
  %v349 = vpop.f32.mrb[0].mxu0
  %350 = vmatprep.mubr.f32.mxu0 0.0
  %351 = vmatmul.mubr.f32.gmra.mrb[0].mxu0 %v129
  %v352 = vpop.f32.mrb[0].mxu0
  %v353 = vadd.f32 %v59, %v352
  %v354 = vpop.f32.mrb[0].mxu0
  %355 = vmatprep.mubr.f32.mxu0 0.0
  %356 = vmatmul.mubr.f32.gmra.mrb[0].mxu0 %v132
  %v357 = vpop.f32.mrb[0].mxu0
  %v358 = vadd.f32 %v59, %v357
  %v359 = vpop.f32.mrb[0].mxu0
  %360 = vmatprep.mubr.f32.mxu0 0.0
  %361 = vmatmul.mubr.f32.gmra.mrb[0].mxu0 %v135
  %v362 = vpop.f32.mrb[0].mxu0
  %v363 = vadd.f32 %v59, %v362
  %v364 = vpop.f32.mrb[0].mxu0
  %365 = vmatprep.mubr.f32.mxu0 0.0
  %366 = vmatmul.mubr.f32.gmra.mrb[0].mxu0 %v138
  %v367 = vpop.f32.mrb[0].mxu0
  %v368 = vadd.f32 %v59, %v367
  %v369 = vpop.f32.mrb[0].mxu0
  %370 = vmatprep.mubr.f32.mxu0 0.0
  %371 = vmatmul.mubr.f32.gmra.mrb[0].mxu0 %v141
  %v372 = vpop.f32.mrb[0].mxu0
  %v373 = vadd.f32 %v59, %v372
  %v374 = vpop.f32.mrb[0].mxu0
  %375 = vmatprep.mubr.f32.mxu0 0.0
  %376 = vmatmul.mubr.f32.gmra.mrb[0].mxu0 %v144
  %v377 = vpop.f32.mrb[0].mxu0
  %v378 = vadd.f32 %v59, %v377
  %v379 = vpop.f32.mrb[0].mxu0
  %380 = vmatprep.mubr.f32.mxu0 0.0
  %381 = vmatmul.mubr.f32.gmra.mrb[0].mxu0 %v147
  %v382 = vpop.f32.mrb[0].mxu0
  %v383 = vadd.f32 %v59, %v382
  %v384 = vpop.f32.mrb[0].mxu0
  %385 = vmatprep.mubr.f32.mxu0 0.0
  %386 = vmatmul.mubr.f32.gmra.mrb[0].mxu0 %v150
  %v387 = vpop.f32.mrb[0].mxu0
  %v388 = vadd.f32 %v59, %v387
  %v389 = vpop.f32.mrb[0].mxu0
  %390 = vmatprep.mubr.f32.mxu0 0.0
  %391 = vmatmul.mubr.f32.gmra.mrb[0].mxu0 %v153
  %v392 = vpop.f32.mrb[0].mxu0
  %v393 = vadd.f32 %v59, %v392
  %v394 = vpop.f32.mrb[0].mxu0
  %395 = vmatprep.mubr.f32.mxu0 0.0
  %396 = vmatmul.mubr.f32.gmra.mrb[0].mxu0 %v156
  %v397 = vpop.f32.mrb[0].mxu0
  %v398 = vadd.f32 %v59, %v397
  %v399 = vpop.f32.mrb[0].mxu0
  %400 = vmatprep.mubr.f32.mxu0 0.0
  %401 = vmatmul.mubr.f32.gmra.mrb[0].mxu0 %v159
  %v402 = vpop.f32.mrb[0].mxu0
  %v403 = vadd.f32 %v59, %v402
  %v404 = vpop.f32.mrb[0].mxu0
  %405 = vmatprep.mubr.f32.mxu0 0.0
  %406 = vmatmul.mubr.f32.gmra.mrb[0].mxu0 %v162
  %v407 = vpop.f32.mrb[0].mxu0
  %v408 = vadd.f32 %v59, %v407
  %v409 = vpop.f32.mrb[0].mxu0
  %410 = vmatprep.mubr.f32.mxu0 0.0
  %411 = vmatmul.mubr.f32.gmra.mrb[0].mxu0 %v165
  %v412 = vpop.f32.mrb[0].mxu0
  %v413 = vadd.f32 %v59, %v412
  %v414 = vpop.f32.mrb[0].mxu0
  %415 = vmatprep.mubr.f32.mxu0 0.0
  %416 = vmatmul.mubr.f32.gmra.mrb[0].mxu0 %v168
  %v417 = vpop.f32.mrb[0].mxu0
  %v418 = vadd.f32 %v59, %v417
  %v419 = vpop.f32.mrb[0].mxu0
  %420 = vmatprep.mubr.f32.mxu0 0.0
  %421 = vmatmul.mubr.f32.gmra.mrb[0].mxu0 %v171
  %v422 = vpop.f32.mrb[0].mxu0
  %v423 = vadd.f32 %v59, %v422
  %v424 = vpop.f32.mrb[0].mxu0
  %425 = vmatprep.mubr.f32.mxu0 0.0
  %426 = vmatmul.mubr.f32.gmra.mrb[0].mxu0 %v174
  %v427 = vpop.f32.mrb[0].mxu0
  %v428 = vadd.f32 %v59, %v427
  %v429 = vpop.f32.mrb[0].mxu0
  %430 = vdwg.mxu0
  %431 = vst [vmem:[%s3] sm:$0xff] %v243
  %432 = vst [vmem:[%s3 + $0x8] sm:$0xff] %v248
  %433 = vst [vmem:[%s3 + $0x10] sm:$0xff] %v253
  %434 = vst [vmem:[%s3 + $0x18] sm:$0xff] %v258
  %435 = vst [vmem:[%s3 + $0x20] sm:$0xff] %v263
  %436 = vst [vmem:[%s3 + $0x28] sm:$0xff] %v268
  %437 = vst [vmem:[%s3 + $0x30] sm:$0xff] %v273
  %438 = vst [vmem:[%s3 + $0x38] sm:$0xff] %v278
  %439 = vst [vmem:[%s3 + $0x40] sm:$0xff] %v283
  %440 = vst [vmem:[%s3 + $0x48] sm:$0xff] %v288
  %441 = vst [vmem:[%s3 + $0x50] sm:$0xff] %v293
  %442 = vst [vmem:[%s3 + $0x58] sm:$0xff] %v298
  %443 = vst [vmem:[%s3 + $0x60] sm:$0xff] %v303
  %444 = vst [vmem:[%s3 + $0x68] sm:$0xff] %v308
  %445 = vst [vmem:[%s3 + $0x70] sm:$0xff] %v313
  %446 = vst [vmem:[%s3 + $0x78] sm:$0xff] %v318
  %447 = vst [vmem:[%s3 + $0x80] sm:$0xff] %v323
  %448 = vst [vmem:[%s3 + $0x88] sm:$0xff] %v328
  %449 = vst [vmem:[%s3 + $0x90] sm:$0xff] %v333
  %450 = vst [vmem:[%s3 + $0x98] sm:$0xff] %v338
  %451 = vst [vmem:[%s3 + $0xa0] sm:$0xff] %v343
  %452 = vst [vmem:[%s3 + $0xa8] sm:$0xff] %v348
  %453 = vst [vmem:[%s3 + $0xb0] sm:$0xff] %v353
  %454 = vst [vmem:[%s3 + $0xb8] sm:$0xff] %v358
  %455 = vst [vmem:[%s3 + $0xc0] sm:$0xff] %v363
  %456 = vst [vmem:[%s3 + $0xc8] sm:$0xff] %v368
  %457 = vst [vmem:[%s3 + $0xd0] sm:$0xff] %v373
  %458 = vst [vmem:[%s3 + $0xd8] sm:$0xff] %v378
  %459 = vst [vmem:[%s3 + $0xe0] sm:$0xff] %v383
  %460 = vst [vmem:[%s3 + $0xe8] sm:$0xff] %v388
  %461 = vst [vmem:[%s3 + $0xf0] sm:$0xff] %v393
  %462 = vst [vmem:[%s3 + $0xf8] sm:$0xff] %v398
  %463 = vst [vmem:[%s3 + $0x100] sm:$0xff] %v403
  %464 = vst [vmem:[%s3 + $0x108] sm:$0xff] %v408
  %465 = vst [vmem:[%s3 + $0x110] sm:$0xff] %v413
  %466 = vst [vmem:[%s3 + $0x118] sm:$0xff] %v418
  %467 = vst [vmem:[%s3 + $0x120] sm:$0xff] %v423
  %468 = vst [vmem:[%s3 + $0x128] sm:$0xff] %v428
  // Predicated region
  $region14: #{upsample3d_conv.11} parent=0 // pred_check
    _
  $region15: #{upsample3d_conv.11} parent=0 // pred_check_branch
    %470 = sbr.rel (0) target = $region17
  $region16: #{upsample3d_conv.11} parent=0 // pred_region
    _
  $region17: #{upsample3d_conv.11} parent=0 // pred_fallthru
    _
  // Predicated region
  $region18: #{upsample3d_conv.11} parent=0 // pred_check
    _
  $region19: #{upsample3d_conv.11} parent=0 // pred_check_branch
    %472 = sbr.rel (0) target = $region21
  $region20: #{upsample3d_conv.11} parent=0 // pred_region
    _
  $region21: #{upsample3d_conv.11} parent=0 // pred_fallthru
    _

// kernel: upsample3d_conv.15
$region0: #{upsample3d_conv.15}
  #allocation0 [shape = 'u32[]', space=smem, size = 0x4, offset = 0x4, fixed_abs, tag = 'smem constant byte address 0x4 - core index']
  #allocation1 [shape = 'u32[144,128]{1,0:T(1,128)}', space=vmem, size = 0x12000, scoped, tag = 'internal scratch']
  %s0 = inlined_call_operand.vmem [shape: f32[256,32], index: 0, kind: input, shape index: {}]
  %s1 = inlined_call_operand.vmem [shape: f32[32,128], index: 1, kind: input, shape index: {}]
  %s2 = inlined_call_operand.vmem [shape: f32[1,128], index: 2, kind: input, shape index: {}]
  %s3 = inlined_call_operand.vmem [shape: f32[256,128], index: 3, kind: output, shape index: {}]
  %s4 = sld [smem:[#allocation0]]
  $region22: #{upsample3d_conv.15} parent=0
    _
  %s6 = ssub.s32 1, %s4
  %s7 = scalar_select 0, %s6, %s4
  // Predicated region
  $region2: #{upsample3d_conv.15} parent=0 // pred_check
    _
  $region3: #{upsample3d_conv.15} parent=0 // pred_check_branch
    %9 = sbr.rel (0) target = $region5
  $region4: #{upsample3d_conv.15} parent=0 // pred_region
    _
  $region5: #{upsample3d_conv.15} parent=0 // pred_fallthru
    _
  // Predicated region
  $region6: #{upsample3d_conv.15} parent=0 // pred_check
    _
  $region7: #{upsample3d_conv.15} parent=0 // pred_check_branch
    %11 = sbr.rel (0) target = $region9
  $region8: #{upsample3d_conv.15} parent=0 // pred_region
    _
  $region9: #{upsample3d_conv.15} parent=0 // pred_fallthru
    _
  // Predicated region
  $region10: #{upsample3d_conv.15} parent=0 // pred_check
    _
  $region11: #{upsample3d_conv.15} parent=0 // pred_check_branch
    %13 = sbr.rel (0) target = $region13
  $region12: #{upsample3d_conv.15} parent=0 // pred_region
    _
  $region13: #{upsample3d_conv.15} parent=0 // pred_fallthru
    _
  %v14 = vld [vmem:[%s0] sm:$0xff]
  %v15 = vld [vmem:[%s0 + $0x8] sm:$0xff]
  %v16 = vld [vmem:[%s0 + $0x10] sm:$0xff]
  %v17 = vld [vmem:[%s0 + $0x18] sm:$0xff]
  %v18 = vld [vmem:[%s0 + $0x20] sm:$0xff]
  %v19 = vld [vmem:[%s0 + $0x28] sm:$0xff]
  %v20 = vld [vmem:[%s0 + $0x30] sm:$0xff]
  %v21 = vld [vmem:[%s0 + $0x38] sm:$0xff]
  %v22 = vld [vmem:[%s0 + $0x40] sm:$0xff]
  %v23 = vld [vmem:[%s0 + $0x48] sm:$0xff]
  %v24 = vld [vmem:[%s0 + $0x50] sm:$0xff]
  %v25 = vld [vmem:[%s0 + $0x58] sm:$0xff]
  %v26 = vld [vmem:[%s0 + $0x60] sm:$0xff]
  %v27 = vld [vmem:[%s0 + $0x68] sm:$0xff]
  %v28 = vld [vmem:[%s0 + $0x70] sm:$0xff]
  %v29 = vld [vmem:[%s0 + $0x78] sm:$0xff]
  %v30 = vld [vmem:[%s0 + $0x80] sm:$0xff]
  %v31 = vld [vmem:[%s0 + $0x88] sm:$0xff]
  %v32 = vld [vmem:[%s0 + $0x90] sm:$0xff]
  %v33 = vld [vmem:[%s0 + $0x98] sm:$0xff]
  %v34 = vld [vmem:[%s0 + $0xa0] sm:$0xff]
  %v35 = vld [vmem:[%s0 + $0xa8] sm:$0xff]
  %v36 = vld [vmem:[%s0 + $0xb0] sm:$0xff]
  %v37 = vld [vmem:[%s0 + $0xb8] sm:$0xff]
  %v38 = vld [vmem:[%s0 + $0xc0] sm:$0xff]
  %v39 = vld [vmem:[%s0 + $0xc8] sm:$0xff]
  %v40 = vld [vmem:[%s0 + $0xd0] sm:$0xff]
  %v41 = vld [vmem:[%s0 + $0xd8] sm:$0xff]
  %v42 = vld [vmem:[%s0 + $0xe0] sm:$0xff]
  %v43 = vld [vmem:[%s0 + $0xe8] sm:$0xff]
  %v44 = vld [vmem:[%s0 + $0xf0] sm:$0xff]
  %v45 = vld [vmem:[%s0 + $0xf8] sm:$0xff]
  %v46 = vld [vmem:[%s1] sm:$0xff]
  %v47 = vld [vmem:[%s1 + $0x8] sm:$0xff]
  %v48 = vld [vmem:[%s1 + $0x10] sm:$0xff]
  %v49 = vld [vmem:[%s1 + $0x18] sm:$0xff]
  %v50 = vld [vmem:[%s2] sm:$0x1]
  %v52 = vlaneseq
  %v53 = vshrl.u32 %v52, 7
  %v54 = vsub.s32 0, %v53
  %v55 = vrot.slane %v50, %v54
  %vm57 = vcmask 261120
  %v59 = vsel %vm57, %v14, 0
  %v62 = vsel %vm57, %v15, 0
  %v65 = vsel %vm57, %v16, 0
  %v68 = vsel %vm57, %v17, 0
  %v71 = vsel %vm57, %v18, 0
  %v74 = vsel %vm57, %v19, 0
  %v77 = vsel %vm57, %v20, 0
  %v80 = vsel %vm57, %v21, 0
  %v83 = vsel %vm57, %v22, 0
  %v86 = vsel %vm57, %v23, 0
  %v89 = vsel %vm57, %v24, 0
  %v92 = vsel %vm57, %v25, 0
  %v95 = vsel %vm57, %v26, 0
  %v98 = vsel %vm57, %v27, 0
  %v101 = vsel %vm57, %v28, 0
  %v104 = vsel %vm57, %v29, 0
  %v107 = vsel %vm57, %v30, 0
  %v110 = vsel %vm57, %v31, 0
  %v113 = vsel %vm57, %v32, 0
  %v116 = vsel %vm57, %v33, 0
  %v119 = vsel %vm57, %v34, 0
  %v122 = vsel %vm57, %v35, 0
  %v125 = vsel %vm57, %v36, 0
  %v128 = vsel %vm57, %v37, 0
  %v131 = vsel %vm57, %v38, 0
  %v134 = vsel %vm57, %v39, 0
  %v137 = vsel %vm57, %v40, 0
  %v140 = vsel %vm57, %v41, 0
  %v143 = vsel %vm57, %v42, 0
  %v146 = vsel %vm57, %v43, 0
  %v149 = vsel %vm57, %v44, 0
  %v152 = vsel %vm57, %v45, 0
  %154 = vmatprep.subr.mxu0 0.0
  %155 = vmatpush1.msra.mxu0 %v46
  %156 = vmatprep.subr.mxu0 0.0
  %157 = vmatpush1.msra.mxu0 %v47
  %158 = vmatprep.subr.mxu0 0.0
  %159 = vmatpush1.msra.mxu0 %v48
  %160 = vmatprep.subr.mxu0 0.0
  %161 = vmatpush1.msra.mxu0 %v49
  %162 = vmatprep.subr.mxu0 0.0
  %163 = vmatpush1.msra.mxu0 0.0
  %164 = vmatprep.subr.mxu0 0.0
  %165 = vmatpush1.msra.mxu0 0.0
  %166 = vmatprep.subr.mxu0 0.0
  %167 = vmatpush1.msra.mxu0 0.0
  %168 = vmatprep.subr.mxu0 0.0
  %169 = vmatpush1.msra.mxu0 0.0
  %170 = vmatprep.subr.mxu0 0.0
  %171 = vmatpush1.msra.mxu0 0.0
  %172 = vmatprep.subr.mxu0 0.0
  %173 = vmatpush1.msra.mxu0 0.0
  %174 = vmatprep.subr.mxu0 0.0
  %175 = vmatpush1.msra.mxu0 0.0
  %176 = vmatprep.subr.mxu0 0.0
  %177 = vmatpush1.msra.mxu0 0.0
  %178 = vmatprep.subr.mxu0 0.0
  %179 = vmatpush1.msra.mxu0 0.0
  %180 = vmatprep.subr.mxu0 0.0
  %181 = vmatpush1.msra.mxu0 0.0
  %182 = vmatprep.subr.mxu0 0.0
  %183 = vmatpush1.msra.mxu0 0.0
  %184 = vmatprep.subr.mxu0 0.0
  %185 = vmatpush1.msra.mxu0 0.0
  %186 = vmatprep.subr.mxu0 0.0
  %187 = vmatpush1.msra.mxu0 0.0
  %188 = vmatprep.subr.mxu0 0.0
  %189 = vmatpush1.msra.mxu0 0.0
  %190 = vmatprep.subr.mxu0 0.0
  %191 = vmatpush1.msra.mxu0 0.0
  %192 = vmatprep.subr.mxu0 0.0
  %193 = vmatpush1.msra.mxu0 0.0
  %194 = vmatprep.subr.mxu0 0.0
  %195 = vmatpush1.msra.mxu0 0.0
  %196 = vmatprep.subr.mxu0 0.0
  %197 = vmatpush1.msra.mxu0 0.0
  %198 = vmatprep.subr.mxu0 0.0
  %199 = vmatpush1.msra.mxu0 0.0
  %200 = vmatprep.subr.mxu0 0.0
  %201 = vmatpush1.msra.mxu0 0.0
  %202 = vmatprep.subr.mxu0 0.0
  %203 = vmatpush1.msra.mxu0 0.0
  %204 = vmatprep.subr.mxu0 0.0
  %205 = vmatpush1.msra.mxu0 0.0
  %206 = vmatprep.subr.mxu0 0.0
  %207 = vmatpush1.msra.mxu0 0.0
  %208 = vmatprep.subr.mxu0 0.0
  %209 = vmatpush1.msra.mxu0 0.0
  %210 = vmatprep.subr.mxu0 0.0
  %211 = vmatpush1.msra.mxu0 0.0
  %212 = vmatprep.subr.mxu0 0.0
  %213 = vmatpush1.msra.mxu0 0.0
  %214 = vmatprep.subr.mxu0 0.0
  %215 = vmatpush1.msra.mxu0 0.0
  %216 = vmatprep.subr.mxu0 0.0
  %217 = vmatpush1.msra.mxu0 0.0
  %218 = vmatprep.mubr.f32.mxu0 0.0
  %219 = vmatmul.mubr.f32.gmra.mrb[0].mxu0 %v59
  %v220 = vpop.f32.mrb[0].mxu0
  %v221 = vadd.f32 %v55, %v220
  %v222 = vpop.f32.mrb[0].mxu0
  %223 = vmatprep.mubr.f32.mxu0 0.0
  %224 = vmatmul.mubr.f32.gmra.mrb[0].mxu0 %v62
  %v225 = vpop.f32.mrb[0].mxu0
  %v226 = vadd.f32 %v55, %v225
  %v227 = vpop.f32.mrb[0].mxu0
  %228 = vmatprep.mubr.f32.mxu0 0.0
  %229 = vmatmul.mubr.f32.gmra.mrb[0].mxu0 %v65
  %v230 = vpop.f32.mrb[0].mxu0
  %v231 = vadd.f32 %v55, %v230
  %v232 = vpop.f32.mrb[0].mxu0
  %233 = vmatprep.mubr.f32.mxu0 0.0
  %234 = vmatmul.mubr.f32.gmra.mrb[0].mxu0 %v68
  %v235 = vpop.f32.mrb[0].mxu0
  %v236 = vadd.f32 %v55, %v235
  %v237 = vpop.f32.mrb[0].mxu0
  %238 = vmatprep.mubr.f32.mxu0 0.0
  %239 = vmatmul.mubr.f32.gmra.mrb[0].mxu0 %v71
  %v240 = vpop.f32.mrb[0].mxu0
  %v241 = vadd.f32 %v55, %v240
  %v242 = vpop.f32.mrb[0].mxu0
  %243 = vmatprep.mubr.f32.mxu0 0.0
  %244 = vmatmul.mubr.f32.gmra.mrb[0].mxu0 %v74
  %v245 = vpop.f32.mrb[0].mxu0
  %v246 = vadd.f32 %v55, %v245
  %v247 = vpop.f32.mrb[0].mxu0
  %248 = vmatprep.mubr.f32.mxu0 0.0
  %249 = vmatmul.mubr.f32.gmra.mrb[0].mxu0 %v77
  %v250 = vpop.f32.mrb[0].mxu0
  %v251 = vadd.f32 %v55, %v250
  %v252 = vpop.f32.mrb[0].mxu0
  %253 = vmatprep.mubr.f32.mxu0 0.0
  %254 = vmatmul.mubr.f32.gmra.mrb[0].mxu0 %v80
  %v255 = vpop.f32.mrb[0].mxu0
  %v256 = vadd.f32 %v55, %v255
  %v257 = vpop.f32.mrb[0].mxu0
  %258 = vmatprep.mubr.f32.mxu0 0.0
  %259 = vmatmul.mubr.f32.gmra.mrb[0].mxu0 %v83
  %v260 = vpop.f32.mrb[0].mxu0
  %v261 = vadd.f32 %v55, %v260
  %v262 = vpop.f32.mrb[0].mxu0
  %263 = vmatprep.mubr.f32.mxu0 0.0
  %264 = vmatmul.mubr.f32.gmra.mrb[0].mxu0 %v86
  %v265 = vpop.f32.mrb[0].mxu0
  %v266 = vadd.f32 %v55, %v265
  %v267 = vpop.f32.mrb[0].mxu0
  %268 = vmatprep.mubr.f32.mxu0 0.0
  %269 = vmatmul.mubr.f32.gmra.mrb[0].mxu0 %v89
  %v270 = vpop.f32.mrb[0].mxu0
  %v271 = vadd.f32 %v55, %v270
  %v272 = vpop.f32.mrb[0].mxu0
  %273 = vmatprep.mubr.f32.mxu0 0.0
  %274 = vmatmul.mubr.f32.gmra.mrb[0].mxu0 %v92
  %v275 = vpop.f32.mrb[0].mxu0
  %v276 = vadd.f32 %v55, %v275
  %v277 = vpop.f32.mrb[0].mxu0
  %278 = vmatprep.mubr.f32.mxu0 0.0
  %279 = vmatmul.mubr.f32.gmra.mrb[0].mxu0 %v95
  %v280 = vpop.f32.mrb[0].mxu0
  %v281 = vadd.f32 %v55, %v280
  %v282 = vpop.f32.mrb[0].mxu0
  %283 = vmatprep.mubr.f32.mxu0 0.0
  %284 = vmatmul.mubr.f32.gmra.mrb[0].mxu0 %v98
  %v285 = vpop.f32.mrb[0].mxu0
  %v286 = vadd.f32 %v55, %v285
  %v287 = vpop.f32.mrb[0].mxu0
  %288 = vmatprep.mubr.f32.mxu0 0.0
  %289 = vmatmul.mubr.f32.gmra.mrb[0].mxu0 %v101
  %v290 = vpop.f32.mrb[0].mxu0
  %v291 = vadd.f32 %v55, %v290
  %v292 = vpop.f32.mrb[0].mxu0
  %293 = vmatprep.mubr.f32.mxu0 0.0
  %294 = vmatmul.mubr.f32.gmra.mrb[0].mxu0 %v104
  %v295 = vpop.f32.mrb[0].mxu0
  %v296 = vadd.f32 %v55, %v295
  %v297 = vpop.f32.mrb[0].mxu0
  %298 = vmatprep.mubr.f32.mxu0 0.0
  %299 = vmatmul.mubr.f32.gmra.mrb[0].mxu0 %v107
  %v300 = vpop.f32.mrb[0].mxu0
  %v301 = vadd.f32 %v55, %v300
  %v302 = vpop.f32.mrb[0].mxu0
  %303 = vmatprep.mubr.f32.mxu0 0.0
  %304 = vmatmul.mubr.f32.gmra.mrb[0].mxu0 %v110
  %v305 = vpop.f32.mrb[0].mxu0
  %v306 = vadd.f32 %v55, %v305
  %v307 = vpop.f32.mrb[0].mxu0
  %308 = vmatprep.mubr.f32.mxu0 0.0
  %309 = vmatmul.mubr.f32.gmra.mrb[0].mxu0 %v113
  %v310 = vpop.f32.mrb[0].mxu0
  %v311 = vadd.f32 %v55, %v310
  %v312 = vpop.f32.mrb[0].mxu0
  %313 = vmatprep.mubr.f32.mxu0 0.0
  %314 = vmatmul.mubr.f32.gmra.mrb[0].mxu0 %v116
  %v315 = vpop.f32.mrb[0].mxu0
  %v316 = vadd.f32 %v55, %v315
  %v317 = vpop.f32.mrb[0].mxu0
  %318 = vmatprep.mubr.f32.mxu0 0.0
  %319 = vmatmul.mubr.f32.gmra.mrb[0].mxu0 %v119
  %v320 = vpop.f32.mrb[0].mxu0
  %v321 = vadd.f32 %v55, %v320
  %v322 = vpop.f32.mrb[0].mxu0
  %323 = vmatprep.mubr.f32.mxu0 0.0
  %324 = vmatmul.mubr.f32.gmra.mrb[0].mxu0 %v122
  %v325 = vpop.f32.mrb[0].mxu0
  %v326 = vadd.f32 %v55, %v325
  %v327 = vpop.f32.mrb[0].mxu0
  %328 = vmatprep.mubr.f32.mxu0 0.0
  %329 = vmatmul.mubr.f32.gmra.mrb[0].mxu0 %v125
  %v330 = vpop.f32.mrb[0].mxu0
  %v331 = vadd.f32 %v55, %v330
  %v332 = vpop.f32.mrb[0].mxu0
  %333 = vmatprep.mubr.f32.mxu0 0.0
  %334 = vmatmul.mubr.f32.gmra.mrb[0].mxu0 %v128
  %v335 = vpop.f32.mrb[0].mxu0
  %v336 = vadd.f32 %v55, %v335
  %v337 = vpop.f32.mrb[0].mxu0
  %338 = vmatprep.mubr.f32.mxu0 0.0
  %339 = vmatmul.mubr.f32.gmra.mrb[0].mxu0 %v131
  %v340 = vpop.f32.mrb[0].mxu0
  %v341 = vadd.f32 %v55, %v340
  %v342 = vpop.f32.mrb[0].mxu0
  %343 = vmatprep.mubr.f32.mxu0 0.0
  %344 = vmatmul.mubr.f32.gmra.mrb[0].mxu0 %v134
  %v345 = vpop.f32.mrb[0].mxu0
  %v346 = vadd.f32 %v55, %v345
  %v347 = vpop.f32.mrb[0].mxu0
  %348 = vmatprep.mubr.f32.mxu0 0.0
  %349 = vmatmul.mubr.f32.gmra.mrb[0].mxu0 %v137
  %v350 = vpop.f32.mrb[0].mxu0
  %v351 = vadd.f32 %v55, %v350
  %v352 = vpop.f32.mrb[0].mxu0
  %353 = vmatprep.mubr.f32.mxu0 0.0
  %354 = vmatmul.mubr.f32.gmra.mrb[0].mxu0 %v140
  %v355 = vpop.f32.mrb[0].mxu0
  %v356 = vadd.f32 %v55, %v355
  %v357 = vpop.f32.mrb[0].mxu0
  %358 = vmatprep.mubr.f32.mxu0 0.0
  %359 = vmatmul.mubr.f32.gmra.mrb[0].mxu0 %v143
  %v360 = vpop.f32.mrb[0].mxu0
  %v361 = vadd.f32 %v55, %v360
  %v362 = vpop.f32.mrb[0].mxu0
  %363 = vmatprep.mubr.f32.mxu0 0.0
  %364 = vmatmul.mubr.f32.gmra.mrb[0].mxu0 %v146
  %v365 = vpop.f32.mrb[0].mxu0
  %v366 = vadd.f32 %v55, %v365
  %v367 = vpop.f32.mrb[0].mxu0
  %368 = vmatprep.mubr.f32.mxu0 0.0
  %369 = vmatmul.mubr.f32.gmra.mrb[0].mxu0 %v149
  %v370 = vpop.f32.mrb[0].mxu0
  %v371 = vadd.f32 %v55, %v370
  %v372 = vpop.f32.mrb[0].mxu0
  %373 = vmatprep.mubr.f32.mxu0 0.0
  %374 = vmatmul.mubr.f32.gmra.mrb[0].mxu0 %v152
  %v375 = vpop.f32.mrb[0].mxu0
  %v376 = vadd.f32 %v55, %v375
  %v377 = vpop.f32.mrb[0].mxu0
  %378 = vdwg.mxu0
  %379 = vst [vmem:[%s3] sm:$0xff] %v221
  %380 = vst [vmem:[%s3 + $0x8] sm:$0xff] %v226
  %381 = vst [vmem:[%s3 + $0x10] sm:$0xff] %v231
  %382 = vst [vmem:[%s3 + $0x18] sm:$0xff] %v236
  %383 = vst [vmem:[%s3 + $0x20] sm:$0xff] %v241
  %384 = vst [vmem:[%s3 + $0x28] sm:$0xff] %v246
  %385 = vst [vmem:[%s3 + $0x30] sm:$0xff] %v251
  %386 = vst [vmem:[%s3 + $0x38] sm:$0xff] %v256
  %387 = vst [vmem:[%s3 + $0x40] sm:$0xff] %v261
  %388 = vst [vmem:[%s3 + $0x48] sm:$0xff] %v266
  %389 = vst [vmem:[%s3 + $0x50] sm:$0xff] %v271
  %390 = vst [vmem:[%s3 + $0x58] sm:$0xff] %v276
  %391 = vst [vmem:[%s3 + $0x60] sm:$0xff] %v281
  %392 = vst [vmem:[%s3 + $0x68] sm:$0xff] %v286
  %393 = vst [vmem:[%s3 + $0x70] sm:$0xff] %v291
  %394 = vst [vmem:[%s3 + $0x78] sm:$0xff] %v296
  %395 = vst [vmem:[%s3 + $0x80] sm:$0xff] %v301
  %396 = vst [vmem:[%s3 + $0x88] sm:$0xff] %v306
  %397 = vst [vmem:[%s3 + $0x90] sm:$0xff] %v311
  %398 = vst [vmem:[%s3 + $0x98] sm:$0xff] %v316
  %399 = vst [vmem:[%s3 + $0xa0] sm:$0xff] %v321
  %400 = vst [vmem:[%s3 + $0xa8] sm:$0xff] %v326
  %401 = vst [vmem:[%s3 + $0xb0] sm:$0xff] %v331
  %402 = vst [vmem:[%s3 + $0xb8] sm:$0xff] %v336
  %403 = vst [vmem:[%s3 + $0xc0] sm:$0xff] %v341
  %404 = vst [vmem:[%s3 + $0xc8] sm:$0xff] %v346
  %405 = vst [vmem:[%s3 + $0xd0] sm:$0xff] %v351
  %406 = vst [vmem:[%s3 + $0xd8] sm:$0xff] %v356
  %407 = vst [vmem:[%s3 + $0xe0] sm:$0xff] %v361
  %408 = vst [vmem:[%s3 + $0xe8] sm:$0xff] %v366
  %409 = vst [vmem:[%s3 + $0xf0] sm:$0xff] %v371
  %410 = vst [vmem:[%s3 + $0xf8] sm:$0xff] %v376
  // Predicated region
  $region14: #{upsample3d_conv.15} parent=0 // pred_check
    _
  $region15: #{upsample3d_conv.15} parent=0 // pred_check_branch
    %412 = sbr.rel (0) target = $region17
  $region16: #{upsample3d_conv.15} parent=0 // pred_region
    _
  $region17: #{upsample3d_conv.15} parent=0 // pred_fallthru
    _
  // Predicated region
  $region18: #{upsample3d_conv.15} parent=0 // pred_check
    _
  $region19: #{upsample3d_conv.15} parent=0 // pred_check_branch
    %414 = sbr.rel (0) target = $region21
  $region20: #{upsample3d_conv.15} parent=0 // pred_region
    _
  $region21: #{upsample3d_conv.15} parent=0 // pred_fallthru
    _

</llo_original>
